<compile_context>
chip_gen: v6e
topology: v6e:2x2x1
jax: 0.10.0
libtpu: 0.0.40
codegen_flags: <defaults>
</compile_context>

<pallas_src>
import jax
import jax.numpy as jnp
from jax.experimental import pallas as pl
from jax.experimental.pallas import tpu as pltpu


def _pool_dim(n):
    # AvgPool2d(kernel=3, stride=2, padding=1), ceil_mode=False
    return (n + 2 - 3) // 2 + 1


def _window_matrix(shape, out_axis):
    """0/1 selection matrix for a 3-tap, stride-2, pad-1 pooling window.

    Entry is 1 where the (unpadded) input index lies in [2*o - 1, 2*o + 1] for
    output index o; clipping to the valid range makes the zero padding
    implicit.  `out_axis` says which axis of `shape` indexes the output.
    Generated in-kernel (broadcasted_iota) so it never touches HBM.
    """
    o = jax.lax.broadcasted_iota(jnp.int32, shape, out_axis)
    j = jax.lax.broadcasted_iota(jnp.int32, shape, 1 - out_axis)
    c = 2 * o
    return ((j >= c - 1) & (j <= c + 1)).astype(jnp.float32)


def _make_kernel(hs, ws):
    num_levels = len(hs) - 1
    scale = (1.0 / 9.0) ** num_levels   # count_include_pad=True: always /9

    def kernel(x_ref, o_ref):
        x = x_ref[...].astype(jnp.float32)               # (P, H0, W0)
        p = x.shape[0]
        for l in range(num_levels):
            h_in, w_in = hs[l], ws[l]
            h_out, w_out = hs[l + 1], ws[l + 1]
            # Column pool: contract W_l -> W_{l+1}, per plane (batched matmul).
            b = _window_matrix((w_in, w_out), 1)          # (W_l, W_{l+1})
            bb = jnp.broadcast_to(b, (p, w_in, w_out))
            z = jnp.einsum('phw,pwo->pho', x, bb,
                           preferred_element_type=jnp.float32)
            # Row pool: contract H_l -> H_{l+1}, per plane (batched matmul).
            a = _window_matrix((h_out, h_in), 0)          # (H_{l+1}, H_l)
            ab = jnp.broadcast_to(a, (p, h_out, h_in))
            x = jnp.einsum('poh,phd->pod', ab, z,
                           preferred_element_type=jnp.float32)
        # TODO(synk): for bf16 activations keep x / masks in bf16 on the MXU
        # (f32 accumulate) -- not done here to hold the f32 1e-5 tolerance.
        o_ref[...] = (x * scale).astype(o_ref.dtype)

    return kernel


def _vmem_cost(p, hs, ws, itemsize):
    """Estimated VMEM bytes for a P-plane grid step (I/O double-buffered,
    plus the worst-case live f32 temporaries inside one level)."""
    c = 2 * p * hs[0] * ws[0] * itemsize           # input block (x2 buffers)
    c += 2 * p * hs[-1] * ws[-1] * itemsize        # output block (x2 buffers)
    live = 0
    for l in range(len(hs) - 1):
        lvl = 4 * p * (hs[l] * ws[l]               # x_l
                       + hs[l] * ws[l + 1]         # column-pooled z
                       + hs[l + 1] * ws[l + 1])    # x_{l+1}
        live = max(live, lvl)
    return c + live


def _choose_plane_batch(nc, hs, ws, itemsize, budget):
    """Planes per grid step: largest that fits the VMEM budget; prefer an
    even multi-step grid (megacore) only when each step moves >= 1 MiB."""
    divisors = [p for p in range(1, nc + 1) if nc % p == 0]
    fits = [p for p in divisors if _vmem_cost(p, hs, ws, itemsize) <= budget]
    if not fits:
        # TODO(synk): a single plane exceeding the budget would need spatial
        # (H) tiling with halo handling; not needed for CGNet input shapes.
        return 1
    good = [p for p in fits
            if (nc // p) >= 2 and (nc // p) % 2 == 0
            and p * hs[0] * ws[0] * itemsize >= (1 << 20)]
    return max(good) if good else max(fits)


def input_injection(x, num_downsampling):
    """Forward pass of InputInjection: repeated AvgPool2d(3, stride=2, pad=1)."""
    if num_downsampling == 0:
        return x
    N, C, H, W = x.shape
    nc = N * C
    itemsize = x.dtype.itemsize

    hs, ws = [H], [W]
    for _ in range(num_downsampling):
        hs.append(_pool_dim(hs[-1]))
        ws.append(_pool_dim(ws[-1]))

    # Generation-aware VMEM planning.
    try:
        vmem_cap = pltpu.get_tpu_info().vmem_capacity_bytes
    except Exception:
        vmem_cap = 64 << 20
    budget = min(vmem_cap // 4, 16 << 20)

    p = _choose_plane_batch(nc, hs, ws, itemsize, budget)
    grid = (nc // p,)

    est = _vmem_cost(p, hs, ws, itemsize)
    vmem_limit = int(min(max(2 * est, 16 << 20), min(32 << 20, vmem_cap // 2)))

    flops = 0
    for l in range(num_downsampling):
        flops += 2 * nc * (hs[l] * ws[l] * ws[l + 1]
                           + hs[l + 1] * hs[l] * ws[l + 1])
    bytes_accessed = nc * (H * W + hs[-1] * ws[-1]) * itemsize

    xs = x.reshape(nc, H, W)   # free view, no HBM relayout

    out = pl.pallas_call(
        _make_kernel(tuple(hs), tuple(ws)),
        out_shape=jax.ShapeDtypeStruct((nc, hs[-1], ws[-1]), x.dtype),
        grid=grid,
        in_specs=[pl.BlockSpec((p, H, W), lambda i: (i, 0, 0))],
        out_specs=pl.BlockSpec((p, hs[-1], ws[-1]), lambda i: (i, 0, 0)),
        compiler_params=pltpu.CompilerParams(
            dimension_semantics=("parallel",),
            vmem_limit_bytes=vmem_limit),
        cost_estimate=pl.CostEstimate(
            flops=flops, transcendentals=0, bytes_accessed=bytes_accessed),
    )(xs)

    return out.reshape(N, C, hs[-1], ws[-1])   # free view


def _reference(x, num_downsampling):
    """Pure-JAX reference (AvgPool2d with count_include_pad=True)."""
    for _ in range(num_downsampling):
        s = jax.lax.reduce_window(
            x, 0.0, jax.lax.add,
            window_dimensions=(1, 1, 3, 3),
            window_strides=(1, 1, 2, 2),
            padding=((0, 0), (0, 0), (1, 1), (1, 1)))
        x = s / 9.0
    return x


if __name__ == "__main__":
    key = jax.random.PRNGKey(0)
    N, C, H, W = 2, 4, 16, 16
    num_downsampling = 2   # 16 -> 8 -> 4
    x = jax.random.normal(key, (N, C, H, W), dtype=jnp.float32)

    y = input_injection(x, num_downsampling)
    y = jax.block_until_ready(y)

    y_ref = _reference(x, num_downsampling)
    assert y.shape == y_ref.shape, (y.shape, y_ref.shape)
    assert jnp.allclose(y, y_ref, atol=1e-5, rtol=1e-5), "mismatch vs reference"

    print("KERNEL_OK")
</pallas_src>

<mosaic_0001>
module attributes {stable_mosaic.version = 11 : i64} {
  func.func @kernel(%arg0: i32, %arg1: memref<8x16x16xf32, #tpu.memory_space<vmem>>, %arg2: memref<8x4x4xf32, #tpu.memory_space<vmem>>) attributes {dimension_semantics = [#tpu.dimension_semantics<parallel>], iteration_bounds = array<i64: 1>, scalar_prefetch = 0 : i64, scratch_operands = 0 : i64, tpu.core_type = #tpu.core_type<tc>, window_params = [{transform_indices = @transform_0, window_bounds = array<i64: 8, 16, 16>}, {transform_indices = @transform_1, window_bounds = array<i64: 8, 4, 4>}]} {
    %c0 = arith.constant 0 : index
    %c0_0 = arith.constant 0 : index
    %c0_1 = arith.constant 0 : index
    %0 = vector.load %arg1[%c0, %c0_0, %c0_1] : memref<8x16x16xf32, #tpu.memory_space<vmem>>, vector<8x16x16xf32>
    %1 = tpu.iota {dimensions = array<i32: 1>} : vector<16x8xi32>
    %2 = tpu.iota {dimensions = array<i32: 0>} : vector<16x8xi32>
    %c2_i32 = arith.constant 2 : i32
    %3 = vector.broadcast %c2_i32 : i32 to vector<16x8xi32>
    %4 = arith.muli %3, %1 : vector<16x8xi32>
    %c1_i32 = arith.constant 1 : i32
    %5 = vector.broadcast %c1_i32 : i32 to vector<16x8xi32>
    %6 = arith.subi %4, %5 : vector<16x8xi32>
    %7 = arith.cmpi sge, %2, %6 : vector<16x8xi32>
    %c1_i32_2 = arith.constant 1 : i32
    %8 = vector.broadcast %c1_i32_2 : i32 to vector<16x8xi32>
    %9 = arith.addi %4, %8 : vector<16x8xi32>
    %10 = arith.cmpi sle, %2, %9 : vector<16x8xi32>
    %11 = arith.andi %7, %10 : vector<16x8xi1>
    %12 = arith.extui %11 : vector<16x8xi1> to vector<16x8xi32>
    %13 = arith.sitofp %12 : vector<16x8xi32> to vector<16x8xf32>
    %14 = vector.shape_cast %13 : vector<16x8xf32> to vector<1x16x8xf32>
    %15 = vector.broadcast %14 : vector<1x16x8xf32> to vector<8x16x8xf32>
    "tpu.trace_start"() <{level = 10 : i32, message = "phw,pwo->pho"}> : () -> ()
    %cst = arith.constant dense<0.000000e+00> : vector<8x16x8xf32>
    %16 = tpu.matmul %0, %15, %cst {dimension_numbers = #tpu.dot_dimension_numbers<[2], [1], [1], [2], [0, 0, 0, 1, 1, 2], [0], [0]>} : vector<8x16x16xf32>, vector<8x16x8xf32>, vector<8x16x8xf32> -> vector<8x16x8xf32>
    "tpu.trace_stop"() : () -> ()
    %17 = tpu.iota {dimensions = array<i32: 0>} : vector<8x16xi32>
    %18 = tpu.iota {dimensions = array<i32: 1>} : vector<8x16xi32>
    %c2_i32_3 = arith.constant 2 : i32
    %19 = vector.broadcast %c2_i32_3 : i32 to vector<8x16xi32>
    %20 = arith.muli %19, %17 : vector<8x16xi32>
    %c1_i32_4 = arith.constant 1 : i32
    %21 = vector.broadcast %c1_i32_4 : i32 to vector<8x16xi32>
    %22 = arith.subi %20, %21 : vector<8x16xi32>
    %23 = arith.cmpi sge, %18, %22 : vector<8x16xi32>
    %c1_i32_5 = arith.constant 1 : i32
    %24 = vector.broadcast %c1_i32_5 : i32 to vector<8x16xi32>
    %25 = arith.addi %20, %24 : vector<8x16xi32>
    %26 = arith.cmpi sle, %18, %25 : vector<8x16xi32>
    %27 = arith.andi %23, %26 : vector<8x16xi1>
    %28 = arith.extui %27 : vector<8x16xi1> to vector<8x16xi32>
    %29 = arith.sitofp %28 : vector<8x16xi32> to vector<8x16xf32>
    %30 = vector.shape_cast %29 : vector<8x16xf32> to vector<1x8x16xf32>
    %31 = vector.broadcast %30 : vector<1x8x16xf32> to vector<8x8x16xf32>
    "tpu.trace_start"() <{level = 10 : i32, message = "poh,phd->pod"}> : () -> ()
    %cst_6 = arith.constant dense<0.000000e+00> : vector<8x8x8xf32>
    %32 = tpu.matmul %31, %16, %cst_6 {dimension_numbers = #tpu.dot_dimension_numbers<[2], [1], [1], [2], [0, 0, 0, 1, 1, 2], [0], [0]>} : vector<8x8x16xf32>, vector<8x16x8xf32>, vector<8x8x8xf32> -> vector<8x8x8xf32>
    "tpu.trace_stop"() : () -> ()
    %33 = tpu.iota {dimensions = array<i32: 1>} : vector<8x4xi32>
    %34 = tpu.iota {dimensions = array<i32: 0>} : vector<8x4xi32>
    %c2_i32_7 = arith.constant 2 : i32
    %35 = vector.broadcast %c2_i32_7 : i32 to vector<8x4xi32>
    %36 = arith.muli %35, %33 : vector<8x4xi32>
    %c1_i32_8 = arith.constant 1 : i32
    %37 = vector.broadcast %c1_i32_8 : i32 to vector<8x4xi32>
    %38 = arith.subi %36, %37 : vector<8x4xi32>
    %39 = arith.cmpi sge, %34, %38 : vector<8x4xi32>
    %c1_i32_9 = arith.constant 1 : i32
    %40 = vector.broadcast %c1_i32_9 : i32 to vector<8x4xi32>
    %41 = arith.addi %36, %40 : vector<8x4xi32>
    %42 = arith.cmpi sle, %34, %41 : vector<8x4xi32>
    %43 = arith.andi %39, %42 : vector<8x4xi1>
    %44 = arith.extui %43 : vector<8x4xi1> to vector<8x4xi32>
    %45 = arith.sitofp %44 : vector<8x4xi32> to vector<8x4xf32>
    %46 = vector.shape_cast %45 : vector<8x4xf32> to vector<1x8x4xf32>
    %47 = vector.broadcast %46 : vector<1x8x4xf32> to vector<8x8x4xf32>
    "tpu.trace_start"() <{level = 10 : i32, message = "phw,pwo->pho"}> : () -> ()
    %cst_10 = arith.constant dense<0.000000e+00> : vector<8x8x4xf32>
    %48 = tpu.matmul %32, %47, %cst_10 {dimension_numbers = #tpu.dot_dimension_numbers<[2], [1], [1], [2], [0, 0, 0, 1, 1, 2], [0], [0]>} : vector<8x8x8xf32>, vector<8x8x4xf32>, vector<8x8x4xf32> -> vector<8x8x4xf32>
    "tpu.trace_stop"() : () -> ()
    %49 = tpu.iota {dimensions = array<i32: 0>} : vector<4x8xi32>
    %50 = tpu.iota {dimensions = array<i32: 1>} : vector<4x8xi32>
    %c2_i32_11 = arith.constant 2 : i32
    %51 = vector.broadcast %c2_i32_11 : i32 to vector<4x8xi32>
    %52 = arith.muli %51, %49 : vector<4x8xi32>
    %c1_i32_12 = arith.constant 1 : i32
    %53 = vector.broadcast %c1_i32_12 : i32 to vector<4x8xi32>
    %54 = arith.subi %52, %53 : vector<4x8xi32>
    %55 = arith.cmpi sge, %50, %54 : vector<4x8xi32>
    %c1_i32_13 = arith.constant 1 : i32
    %56 = vector.broadcast %c1_i32_13 : i32 to vector<4x8xi32>
    %57 = arith.addi %52, %56 : vector<4x8xi32>
    %58 = arith.cmpi sle, %50, %57 : vector<4x8xi32>
    %59 = arith.andi %55, %58 : vector<4x8xi1>
    %60 = arith.extui %59 : vector<4x8xi1> to vector<4x8xi32>
    %61 = arith.sitofp %60 : vector<4x8xi32> to vector<4x8xf32>
    %62 = vector.shape_cast %61 : vector<4x8xf32> to vector<1x4x8xf32>
    %63 = vector.broadcast %62 : vector<1x4x8xf32> to vector<8x4x8xf32>
    "tpu.trace_start"() <{level = 10 : i32, message = "poh,phd->pod"}> : () -> ()
    %cst_14 = arith.constant dense<0.000000e+00> : vector<8x4x4xf32>
    %64 = tpu.matmul %63, %48, %cst_14 {dimension_numbers = #tpu.dot_dimension_numbers<[2], [1], [1], [2], [0, 0, 0, 1, 1, 2], [0], [0]>} : vector<8x4x8xf32>, vector<8x8x4xf32>, vector<8x4x4xf32> -> vector<8x4x4xf32>
    "tpu.trace_stop"() : () -> ()
    %cst_15 = arith.constant 0.0123456791 : f32
    %65 = vector.broadcast %cst_15 : f32 to vector<8x4x4xf32>
    %66 = arith.mulf %64, %65 : vector<8x4x4xf32>
    %c0_16 = arith.constant 0 : index
    %c0_17 = arith.constant 0 : index
    %c0_18 = arith.constant 0 : index
    %67 = vector.load %arg2[%c0_16, %c0_17, %c0_18] : memref<8x4x4xf32, #tpu.memory_space<vmem>>, vector<8x4x4xf32>
    tpu.vector_store %arg2[%c0_16, %c0_17, %c0_18], %66 {strides = array<i32>} : memref<8x4x4xf32, #tpu.memory_space<vmem>>, vector<8x4x4xf32>,
    return
  }
  func.func @transform_0(%arg0: i32) -> (i32, i32, i32) {
    %c0_i32 = arith.constant 0 : i32
    %c0_i32_0 = arith.constant 0 : i32
    %c0_i32_1 = arith.constant 0 : i32
    return %arg0, %c0_i32, %c0_i32_0 : i32, i32, i32
  }
  func.func @transform_1(%arg0: i32) -> (i32, i32, i32) {
    %c0_i32 = arith.constant 0 : i32
    %c0_i32_0 = arith.constant 0 : i32
    %c0_i32_1 = arith.constant 0 : i32
    return %arg0, %c0_i32, %c0_i32_0 : i32, i32, i32
  }
}

</mosaic_0001>

<llo_original>
// kernel: tpu_custom_call.1
$region0: #{tpu_custom_call.1}
  #allocation0 [shape = 'u32[]', space=smem, size = 0x4, offset = 0x4, fixed_abs, tag = 'smem constant byte address 0x4 - core index']
  #allocation1 [shape = 'u32[144,128]{1,0:T(1,128)}', space=vmem, size = 0x12000, scoped, tag = 'internal scratch']
  %s0 = inlined_call_operand.hbm [shape: f32[8,16,16], index: 0, kind: input, shape index: {}]
  %s1 = inlined_call_operand.vmem [shape: f32[8,4,4], index: 1, kind: output, shape index: {}]
  %s2 = sld [smem:[#allocation0]]
  $region18: #{tpu_custom_call.1} parent=0
    _
  %s4 = ssub.s32 1, %s2
  %s5 = scalar_select 0, %s4, %s2
  $region1: #{tpu_custom_call.1} parent=0
    #allocation2 [shape = 'u8[65536]{0}', space=vmem, size = 0x10000, scoped, tag = 'input window, operand 0, single buffered']
    #allocation3 [shape = 's32[1]{0}', space=sflag, size = 0x4, scoped, tag = 'scoped memory for tpu_custom_call.1']
    %6 = vsyncpa [#allocation3], 0
    // Predicated region
    $region2: #{tpu_custom_call.1} parent=1 // pred_check
      _
    $region3: #{tpu_custom_call.1} parent=1 // pred_check_branch
      %8 = sbr.rel (0) target = $region5
    $region4: #{tpu_custom_call.1} parent=1 // pred_region
      %s10 = ssub.s32 2048, 2048
      %11 = vsyncadd [#allocation3], %s10
      %s12 = sshll.u32 [#allocation2], 4
      %s13 = int_to_ptr.vmem [resolvable:$true] %s12
      %18 = dma.hbm_to_vmem [thread:$0]  %s0, 2048, %s13, [#allocation3], 128, 128, 8
    $region5: #{tpu_custom_call.1} parent=1 // pred_fallthru
      _
    // Predicated region
    $region6: #{tpu_custom_call.1} parent=1 // pred_check
      _
    $region7: #{tpu_custom_call.1} parent=1 // pred_check_branch
      %20 = sbr.rel (0) target = $region9
    $region8: #{tpu_custom_call.1} parent=1 // pred_region
      %21 = dma.done [#allocation3], 2048
    $region9: #{tpu_custom_call.1} parent=1 // pred_fallthru
      _
    %v22 = vld [vmem:[#allocation2] sm:$0xff]
    %v23 = vld [vmem:[#allocation2 + $0x8] sm:$0xff]
    %v24 = vld [vmem:[#allocation2 + $0x10] sm:$0xff]
    %v25 = vld [vmem:[#allocation2 + $0x18] sm:$0xff]
    %v26 = vld [vmem:[#allocation2 + $0x20] sm:$0xff]
    %v27 = vld [vmem:[#allocation2 + $0x28] sm:$0xff]
    %v28 = vld [vmem:[#allocation2 + $0x30] sm:$0xff]
    %v29 = vld [vmem:[#allocation2 + $0x38] sm:$0xff]
    %v30 = vld [vmem:[#allocation2 + $0x40] sm:$0xff]
    %v31 = vld [vmem:[#allocation2 + $0x48] sm:$0xff]
    %v32 = vld [vmem:[#allocation2 + $0x50] sm:$0xff]
    %v33 = vld [vmem:[#allocation2 + $0x58] sm:$0xff]
    %v34 = vld [vmem:[#allocation2 + $0x60] sm:$0xff]
    %v35 = vld [vmem:[#allocation2 + $0x68] sm:$0xff]
    %v36 = vld [vmem:[#allocation2 + $0x70] sm:$0xff]
    %v37 = vld [vmem:[#allocation2 + $0x78] sm:$0xff]
    %v38 = vlaneseq
    %v39 = vand.u32 %v38, 127
    %v40 = vlaneseq
    %v41 = vshrl.u32 %v40, 7
    %v42 = vadd.s32 %v41, 8
    %v43 = vmul.u32 %v39, 2
    %v44 = vsub.s32 %v43, 1
    %vm45 = vcmp.ge.s32.totalorder %v41, %v44
    %vm46 = vcmp.ge.s32.totalorder %v42, %v44
    %v47 = vadd.s32 %v43, 1
    %vm48 = vcmp.le.s32.totalorder %v41, %v47
    %vm49 = vcmp.le.s32.totalorder %v42, %v47
    %vm50 = vmand %vm45, %vm48
    %vm51 = vmand %vm46, %vm49
    %v52 = vsel %vm50, 1, 0
    %v53 = vsel %vm51, 1, 0
    %v54 = vcvt.s32.f32 %v52
    %v55 = vcvt.s32.f32 %v53
    %vm56 = vcmask 130048
    %v58 = vsel %vm56, %v22, 0
    %v61 = vsel %vm56, %v23, 0
    %63 = vmatprep.subr.mxu0 0.0
    %64 = vmatpush1.msra.mxu0 0.0
    %65 = vmatprep.subr.mxu0 0.0
    %66 = vmatpush1.msra.mxu0 0.0
    %67 = vmatprep.subr.mxu0 0.0
    %68 = vmatpush1.msra.mxu0 0.0
    %69 = vmatprep.subr.mxu0 0.0
    %70 = vmatpush1.msra.mxu0 0.0
    %71 = vmatprep.subr.mxu0 0.0
    %72 = vmatpush1.msra.mxu0 0.0
    %73 = vmatprep.subr.mxu0 0.0
    %74 = vmatpush1.msra.mxu0 0.0
    %75 = vmatprep.subr.mxu0 0.0
    %76 = vmatpush1.msra.mxu0 0.0
    %77 = vmatprep.subr.mxu0 0.0
    %78 = vmatpush1.msra.mxu0 0.0
    %79 = vmatprep.subr.mxu0 0.0
    %80 = vmatpush1.msra.mxu0 0.0
    %81 = vmatprep.subr.mxu0 0.0
    %82 = vmatpush1.msra.mxu0 0.0
    %83 = vmatprep.subr.mxu0 0.0
    %84 = vmatpush1.msra.mxu0 0.0
    %85 = vmatprep.subr.mxu0 0.0
    %86 = vmatpush1.msra.mxu0 0.0
    %87 = vmatprep.subr.mxu0 0.0
    %88 = vmatpush1.msra.mxu0 0.0
    %89 = vmatprep.subr.mxu0 0.0
    %90 = vmatpush1.msra.mxu0 0.0
    %91 = vmatprep.subr.mxu0 0.0
    %92 = vmatpush1.msra.mxu0 %v55
    %93 = vmatprep.subr.mxu0 0.0
    %94 = vmatpush1.msra.mxu0 %v54
    %95 = vmatprep.subr.mxu0 0.0
    %96 = vmatpush2.msra.mxu0 0.0
    %97 = vmatprep.subr.mxu0 0.0
    %98 = vmatpush2.msra.mxu0 0.0
    %99 = vmatprep.subr.mxu0 0.0
    %100 = vmatpush2.msra.mxu0 0.0
    %101 = vmatprep.subr.mxu0 0.0
    %102 = vmatpush2.msra.mxu0 0.0
    %103 = vmatprep.subr.mxu0 0.0
    %104 = vmatpush2.msra.mxu0 0.0
    %105 = vmatprep.subr.mxu0 0.0
    %106 = vmatpush2.msra.mxu0 0.0
    %107 = vmatprep.subr.mxu0 0.0
    %108 = vmatpush2.msra.mxu0 0.0
    %109 = vmatprep.subr.mxu0 0.0
    %110 = vmatpush2.msra.mxu0 0.0
    %111 = vmatprep.subr.mxu0 0.0
    %112 = vmatpush2.msra.mxu0 0.0
    %113 = vmatprep.subr.mxu0 0.0
    %114 = vmatpush2.msra.mxu0 0.0
    %115 = vmatprep.subr.mxu0 0.0
    %116 = vmatpush2.msra.mxu0 0.0
    %117 = vmatprep.subr.mxu0 0.0
    %118 = vmatpush2.msra.mxu0 0.0
    %119 = vmatprep.subr.mxu0 0.0
    %120 = vmatpush2.msra.mxu0 0.0
    %121 = vmatprep.subr.mxu0 0.0
    %122 = vmatpush2.msra.mxu0 0.0
    %123 = vmatprep.subr.mxu0 0.0
    %124 = vmatpush2.msra.mxu0 0.0
    %125 = vmatprep.subr.mxu0 0.0
    %126 = vmatpush2.msra.mxu0 0.0
    %127 = vmatprep.mubr.f32.mxu0 0.0
    %128 = vmatmul.mubr.f32.gmra.mxu0 %v58
    %v129 = vpop.f32.mrf.mxu0
    %v130 = vadd.f32 0.0, %v129
    %v131 = vpop.f32.mrf.mxu0
    %132 = vmatprep.mubr.f32.mxu0 0.0
    %133 = vmatmul.mubr.f32.gmra.mxu0 %v61
    %v134 = vpop.f32.mrf.mxu0
    %v135 = vadd.f32 0.0, %v134
    %v136 = vpop.f32.mrf.mxu0
    %137 = vdwg.mxu0
    %v139 = vsel %vm56, %v24, 0
    %v142 = vsel %vm56, %v25, 0
    %144 = vmatprep.subr.mxu0 0.0
    %145 = vmatpush1.msra.mxu0 0.0
    %146 = vmatprep.subr.mxu0 0.0
    %147 = vmatpush1.msra.mxu0 0.0
    %148 = vmatprep.subr.mxu0 0.0
    %149 = vmatpush1.msra.mxu0 0.0
    %150 = vmatprep.subr.mxu0 0.0
    %151 = vmatpush1.msra.mxu0 0.0
    %152 = vmatprep.subr.mxu0 0.0
    %153 = vmatpush1.msra.mxu0 0.0
    %154 = vmatprep.subr.mxu0 0.0
    %155 = vmatpush1.msra.mxu0 0.0
    %156 = vmatprep.subr.mxu0 0.0
    %157 = vmatpush1.msra.mxu0 0.0
    %158 = vmatprep.subr.mxu0 0.0
    %159 = vmatpush1.msra.mxu0 0.0
    %160 = vmatprep.subr.mxu0 0.0
    %161 = vmatpush1.msra.mxu0 0.0
    %162 = vmatprep.subr.mxu0 0.0
    %163 = vmatpush1.msra.mxu0 0.0
    %164 = vmatprep.subr.mxu0 0.0
    %165 = vmatpush1.msra.mxu0 0.0
    %166 = vmatprep.subr.mxu0 0.0
    %167 = vmatpush1.msra.mxu0 0.0
    %168 = vmatprep.subr.mxu0 0.0
    %169 = vmatpush1.msra.mxu0 0.0
    %170 = vmatprep.subr.mxu0 0.0
    %171 = vmatpush1.msra.mxu0 0.0
    %172 = vmatprep.subr.mxu0 0.0
    %173 = vmatpush1.msra.mxu0 %v55
    %174 = vmatprep.subr.mxu0 0.0
    %175 = vmatpush1.msra.mxu0 %v54
    %176 = vmatprep.subr.mxu0 0.0
    %177 = vmatpush2.msra.mxu0 0.0
    %178 = vmatprep.subr.mxu0 0.0
    %179 = vmatpush2.msra.mxu0 0.0
    %180 = vmatprep.subr.mxu0 0.0
    %181 = vmatpush2.msra.mxu0 0.0
    %182 = vmatprep.subr.mxu0 0.0
    %183 = vmatpush2.msra.mxu0 0.0
    %184 = vmatprep.subr.mxu0 0.0
    %185 = vmatpush2.msra.mxu0 0.0
    %186 = vmatprep.subr.mxu0 0.0
    %187 = vmatpush2.msra.mxu0 0.0
    %188 = vmatprep.subr.mxu0 0.0
    %189 = vmatpush2.msra.mxu0 0.0
    %190 = vmatprep.subr.mxu0 0.0
    %191 = vmatpush2.msra.mxu0 0.0
    %192 = vmatprep.subr.mxu0 0.0
    %193 = vmatpush2.msra.mxu0 0.0
    %194 = vmatprep.subr.mxu0 0.0
    %195 = vmatpush2.msra.mxu0 0.0
    %196 = vmatprep.subr.mxu0 0.0
    %197 = vmatpush2.msra.mxu0 0.0
    %198 = vmatprep.subr.mxu0 0.0
    %199 = vmatpush2.msra.mxu0 0.0
    %200 = vmatprep.subr.mxu0 0.0
    %201 = vmatpush2.msra.mxu0 0.0
    %202 = vmatprep.subr.mxu0 0.0
    %203 = vmatpush2.msra.mxu0 0.0
    %204 = vmatprep.subr.mxu0 0.0
    %205 = vmatpush2.msra.mxu0 0.0
    %206 = vmatprep.subr.mxu0 0.0
    %207 = vmatpush2.msra.mxu0 0.0
    %208 = vmatprep.mubr.f32.mxu0 0.0
    %209 = vmatmul.mubr.f32.gmra.mxu0 %v139
    %v210 = vpop.f32.mrf.mxu0
    %v211 = vadd.f32 0.0, %v210
    %v212 = vpop.f32.mrf.mxu0
    %213 = vmatprep.mubr.f32.mxu0 0.0
    %214 = vmatmul.mubr.f32.gmra.mxu0 %v142
    %v215 = vpop.f32.mrf.mxu0
    %v216 = vadd.f32 0.0, %v215
    %v217 = vpop.f32.mrf.mxu0
    %218 = vdwg.mxu0
    %v220 = vsel %vm56, %v26, 0
    %v223 = vsel %vm56, %v27, 0
    %225 = vmatprep.subr.mxu0 0.0
    %226 = vmatpush1.msra.mxu0 0.0
    %227 = vmatprep.subr.mxu0 0.0
    %228 = vmatpush1.msra.mxu0 0.0
    %229 = vmatprep.subr.mxu0 0.0
    %230 = vmatpush1.msra.mxu0 0.0
    %231 = vmatprep.subr.mxu0 0.0
    %232 = vmatpush1.msra.mxu0 0.0
    %233 = vmatprep.subr.mxu0 0.0
    %234 = vmatpush1.msra.mxu0 0.0
    %235 = vmatprep.subr.mxu0 0.0
    %236 = vmatpush1.msra.mxu0 0.0
    %237 = vmatprep.subr.mxu0 0.0
    %238 = vmatpush1.msra.mxu0 0.0
    %239 = vmatprep.subr.mxu0 0.0
    %240 = vmatpush1.msra.mxu0 0.0
    %241 = vmatprep.subr.mxu0 0.0
    %242 = vmatpush1.msra.mxu0 0.0
    %243 = vmatprep.subr.mxu0 0.0
    %244 = vmatpush1.msra.mxu0 0.0
    %245 = vmatprep.subr.mxu0 0.0
    %246 = vmatpush1.msra.mxu0 0.0
    %247 = vmatprep.subr.mxu0 0.0
    %248 = vmatpush1.msra.mxu0 0.0
    %249 = vmatprep.subr.mxu0 0.0
    %250 = vmatpush1.msra.mxu0 0.0
    %251 = vmatprep.subr.mxu0 0.0
    %252 = vmatpush1.msra.mxu0 0.0
    %253 = vmatprep.subr.mxu0 0.0
    %254 = vmatpush1.msra.mxu0 %v55
    %255 = vmatprep.subr.mxu0 0.0
    %256 = vmatpush1.msra.mxu0 %v54
    %257 = vmatprep.subr.mxu0 0.0
    %258 = vmatpush2.msra.mxu0 0.0
    %259 = vmatprep.subr.mxu0 0.0
    %260 = vmatpush2.msra.mxu0 0.0
    %261 = vmatprep.subr.mxu0 0.0
    %262 = vmatpush2.msra.mxu0 0.0
    %263 = vmatprep.subr.mxu0 0.0
    %264 = vmatpush2.msra.mxu0 0.0
    %265 = vmatprep.subr.mxu0 0.0
    %266 = vmatpush2.msra.mxu0 0.0
    %267 = vmatprep.subr.mxu0 0.0
    %268 = vmatpush2.msra.mxu0 0.0
    %269 = vmatprep.subr.mxu0 0.0
    %270 = vmatpush2.msra.mxu0 0.0
    %271 = vmatprep.subr.mxu0 0.0
    %272 = vmatpush2.msra.mxu0 0.0
    %273 = vmatprep.subr.mxu0 0.0
    %274 = vmatpush2.msra.mxu0 0.0
    %275 = vmatprep.subr.mxu0 0.0
    %276 = vmatpush2.msra.mxu0 0.0
    %277 = vmatprep.subr.mxu0 0.0
    %278 = vmatpush2.msra.mxu0 0.0
    %279 = vmatprep.subr.mxu0 0.0
    %280 = vmatpush2.msra.mxu0 0.0
    %281 = vmatprep.subr.mxu0 0.0
    %282 = vmatpush2.msra.mxu0 0.0
    %283 = vmatprep.subr.mxu0 0.0
    %284 = vmatpush2.msra.mxu0 0.0
    %285 = vmatprep.subr.mxu0 0.0
    %286 = vmatpush2.msra.mxu0 0.0
    %287 = vmatprep.subr.mxu0 0.0
    %288 = vmatpush2.msra.mxu0 0.0
    %289 = vmatprep.mubr.f32.mxu0 0.0
    %290 = vmatmul.mubr.f32.gmra.mxu0 %v220
    %v291 = vpop.f32.mrf.mxu0
    %v292 = vadd.f32 0.0, %v291
    %v293 = vpop.f32.mrf.mxu0
    %294 = vmatprep.mubr.f32.mxu0 0.0
    %295 = vmatmul.mubr.f32.gmra.mxu0 %v223
    %v296 = vpop.f32.mrf.mxu0
    %v297 = vadd.f32 0.0, %v296
    %v298 = vpop.f32.mrf.mxu0
    %299 = vdwg.mxu0
    %v301 = vsel %vm56, %v28, 0
    %v304 = vsel %vm56, %v29, 0
    %306 = vmatprep.subr.mxu0 0.0
    %307 = vmatpush1.msra.mxu0 0.0
    %308 = vmatprep.subr.mxu0 0.0
    %309 = vmatpush1.msra.mxu0 0.0
    %310 = vmatprep.subr.mxu0 0.0
    %311 = vmatpush1.msra.mxu0 0.0
    %312 = vmatprep.subr.mxu0 0.0
    %313 = vmatpush1.msra.mxu0 0.0
    %314 = vmatprep.subr.mxu0 0.0
    %315 = vmatpush1.msra.mxu0 0.0
    %316 = vmatprep.subr.mxu0 0.0
    %317 = vmatpush1.msra.mxu0 0.0
    %318 = vmatprep.subr.mxu0 0.0
    %319 = vmatpush1.msra.mxu0 0.0
    %320 = vmatprep.subr.mxu0 0.0
    %321 = vmatpush1.msra.mxu0 0.0
    %322 = vmatprep.subr.mxu0 0.0
    %323 = vmatpush1.msra.mxu0 0.0
    %324 = vmatprep.subr.mxu0 0.0
    %325 = vmatpush1.msra.mxu0 0.0
    %326 = vmatprep.subr.mxu0 0.0
    %327 = vmatpush1.msra.mxu0 0.0
    %328 = vmatprep.subr.mxu0 0.0
    %329 = vmatpush1.msra.mxu0 0.0
    %330 = vmatprep.subr.mxu0 0.0
    %331 = vmatpush1.msra.mxu0 0.0
    %332 = vmatprep.subr.mxu0 0.0
    %333 = vmatpush1.msra.mxu0 0.0
    %334 = vmatprep.subr.mxu0 0.0
    %335 = vmatpush1.msra.mxu0 %v55
    %336 = vmatprep.subr.mxu0 0.0
    %337 = vmatpush1.msra.mxu0 %v54
    %338 = vmatprep.subr.mxu0 0.0
    %339 = vmatpush2.msra.mxu0 0.0
    %340 = vmatprep.subr.mxu0 0.0
    %341 = vmatpush2.msra.mxu0 0.0
    %342 = vmatprep.subr.mxu0 0.0
    %343 = vmatpush2.msra.mxu0 0.0
    %344 = vmatprep.subr.mxu0 0.0
    %345 = vmatpush2.msra.mxu0 0.0
    %346 = vmatprep.subr.mxu0 0.0
    %347 = vmatpush2.msra.mxu0 0.0
    %348 = vmatprep.subr.mxu0 0.0
    %349 = vmatpush2.msra.mxu0 0.0
    %350 = vmatprep.subr.mxu0 0.0
    %351 = vmatpush2.msra.mxu0 0.0
    %352 = vmatprep.subr.mxu0 0.0
    %353 = vmatpush2.msra.mxu0 0.0
    %354 = vmatprep.subr.mxu0 0.0
    %355 = vmatpush2.msra.mxu0 0.0
    %356 = vmatprep.subr.mxu0 0.0
    %357 = vmatpush2.msra.mxu0 0.0
    %358 = vmatprep.subr.mxu0 0.0
    %359 = vmatpush2.msra.mxu0 0.0
    %360 = vmatprep.subr.mxu0 0.0
    %361 = vmatpush2.msra.mxu0 0.0
    %362 = vmatprep.subr.mxu0 0.0
    %363 = vmatpush2.msra.mxu0 0.0
    %364 = vmatprep.subr.mxu0 0.0
    %365 = vmatpush2.msra.mxu0 0.0
    %366 = vmatprep.subr.mxu0 0.0
    %367 = vmatpush2.msra.mxu0 0.0
    %368 = vmatprep.subr.mxu0 0.0
    %369 = vmatpush2.msra.mxu0 0.0
    %370 = vmatprep.mubr.f32.mxu0 0.0
    %371 = vmatmul.mubr.f32.gmra.mxu0 %v301
    %v372 = vpop.f32.mrf.mxu0
    %v373 = vadd.f32 0.0, %v372
    %v374 = vpop.f32.mrf.mxu0
    %375 = vmatprep.mubr.f32.mxu0 0.0
    %376 = vmatmul.mubr.f32.gmra.mxu0 %v304
    %v377 = vpop.f32.mrf.mxu0
    %v378 = vadd.f32 0.0, %v377
    %v379 = vpop.f32.mrf.mxu0
    %380 = vdwg.mxu0
    %v382 = vsel %vm56, %v30, 0
    %v385 = vsel %vm56, %v31, 0
    %387 = vmatprep.subr.mxu0 0.0
    %388 = vmatpush1.msra.mxu0 0.0
    %389 = vmatprep.subr.mxu0 0.0
    %390 = vmatpush1.msra.mxu0 0.0
    %391 = vmatprep.subr.mxu0 0.0
    %392 = vmatpush1.msra.mxu0 0.0
    %393 = vmatprep.subr.mxu0 0.0
    %394 = vmatpush1.msra.mxu0 0.0
    %395 = vmatprep.subr.mxu0 0.0
    %396 = vmatpush1.msra.mxu0 0.0
    %397 = vmatprep.subr.mxu0 0.0
    %398 = vmatpush1.msra.mxu0 0.0
    %399 = vmatprep.subr.mxu0 0.0
    %400 = vmatpush1.msra.mxu0 0.0
    %401 = vmatprep.subr.mxu0 0.0
    %402 = vmatpush1.msra.mxu0 0.0
    %403 = vmatprep.subr.mxu0 0.0
    %404 = vmatpush1.msra.mxu0 0.0
    %405 = vmatprep.subr.mxu0 0.0
    %406 = vmatpush1.msra.mxu0 0.0
    %407 = vmatprep.subr.mxu0 0.0
    %408 = vmatpush1.msra.mxu0 0.0
    %409 = vmatprep.subr.mxu0 0.0
    %410 = vmatpush1.msra.mxu0 0.0
    %411 = vmatprep.subr.mxu0 0.0
    %412 = vmatpush1.msra.mxu0 0.0
    %413 = vmatprep.subr.mxu0 0.0
    %414 = vmatpush1.msra.mxu0 0.0
    %415 = vmatprep.subr.mxu0 0.0
    %416 = vmatpush1.msra.mxu0 %v55
    %417 = vmatprep.subr.mxu0 0.0
    %418 = vmatpush1.msra.mxu0 %v54
    %419 = vmatprep.subr.mxu0 0.0
    %420 = vmatpush2.msra.mxu0 0.0
    %421 = vmatprep.subr.mxu0 0.0
    %422 = vmatpush2.msra.mxu0 0.0
    %423 = vmatprep.subr.mxu0 0.0
    %424 = vmatpush2.msra.mxu0 0.0
    %425 = vmatprep.subr.mxu0 0.0
    %426 = vmatpush2.msra.mxu0 0.0
    %427 = vmatprep.subr.mxu0 0.0
    %428 = vmatpush2.msra.mxu0 0.0
    %429 = vmatprep.subr.mxu0 0.0
    %430 = vmatpush2.msra.mxu0 0.0
    %431 = vmatprep.subr.mxu0 0.0
    %432 = vmatpush2.msra.mxu0 0.0
    %433 = vmatprep.subr.mxu0 0.0
    %434 = vmatpush2.msra.mxu0 0.0
    %435 = vmatprep.subr.mxu0 0.0
    %436 = vmatpush2.msra.mxu0 0.0
    %437 = vmatprep.subr.mxu0 0.0
    %438 = vmatpush2.msra.mxu0 0.0
    %439 = vmatprep.subr.mxu0 0.0
    %440 = vmatpush2.msra.mxu0 0.0
    %441 = vmatprep.subr.mxu0 0.0
    %442 = vmatpush2.msra.mxu0 0.0
    %443 = vmatprep.subr.mxu0 0.0
    %444 = vmatpush2.msra.mxu0 0.0
    %445 = vmatprep.subr.mxu0 0.0
    %446 = vmatpush2.msra.mxu0 0.0
    %447 = vmatprep.subr.mxu0 0.0
    %448 = vmatpush2.msra.mxu0 0.0
    %449 = vmatprep.subr.mxu0 0.0
    %450 = vmatpush2.msra.mxu0 0.0
    %451 = vmatprep.mubr.f32.mxu0 0.0
    %452 = vmatmul.mubr.f32.gmra.mxu0 %v382
    %v453 = vpop.f32.mrf.mxu0
    %v454 = vadd.f32 0.0, %v453
    %v455 = vpop.f32.mrf.mxu0
    %456 = vmatprep.mubr.f32.mxu0 0.0
    %457 = vmatmul.mubr.f32.gmra.mxu0 %v385
    %v458 = vpop.f32.mrf.mxu0
    %v459 = vadd.f32 0.0, %v458
    %v460 = vpop.f32.mrf.mxu0
    %461 = vdwg.mxu0
    %v463 = vsel %vm56, %v32, 0
    %v466 = vsel %vm56, %v33, 0
    %468 = vmatprep.subr.mxu0 0.0
    %469 = vmatpush1.msra.mxu0 0.0
    %470 = vmatprep.subr.mxu0 0.0
    %471 = vmatpush1.msra.mxu0 0.0
    %472 = vmatprep.subr.mxu0 0.0
    %473 = vmatpush1.msra.mxu0 0.0
    %474 = vmatprep.subr.mxu0 0.0
    %475 = vmatpush1.msra.mxu0 0.0
    %476 = vmatprep.subr.mxu0 0.0
    %477 = vmatpush1.msra.mxu0 0.0
    %478 = vmatprep.subr.mxu0 0.0
    %479 = vmatpush1.msra.mxu0 0.0
    %480 = vmatprep.subr.mxu0 0.0
    %481 = vmatpush1.msra.mxu0 0.0
    %482 = vmatprep.subr.mxu0 0.0
    %483 = vmatpush1.msra.mxu0 0.0
    %484 = vmatprep.subr.mxu0 0.0
    %485 = vmatpush1.msra.mxu0 0.0
    %486 = vmatprep.subr.mxu0 0.0
    %487 = vmatpush1.msra.mxu0 0.0
    %488 = vmatprep.subr.mxu0 0.0
    %489 = vmatpush1.msra.mxu0 0.0
    %490 = vmatprep.subr.mxu0 0.0
    %491 = vmatpush1.msra.mxu0 0.0
    %492 = vmatprep.subr.mxu0 0.0
    %493 = vmatpush1.msra.mxu0 0.0
    %494 = vmatprep.subr.mxu0 0.0
    %495 = vmatpush1.msra.mxu0 0.0
    %496 = vmatprep.subr.mxu0 0.0
    %497 = vmatpush1.msra.mxu0 %v55
    %498 = vmatprep.subr.mxu0 0.0
    %499 = vmatpush1.msra.mxu0 %v54
    %500 = vmatprep.subr.mxu0 0.0
    %501 = vmatpush2.msra.mxu0 0.0
    %502 = vmatprep.subr.mxu0 0.0
    %503 = vmatpush2.msra.mxu0 0.0
    %504 = vmatprep.subr.mxu0 0.0
    %505 = vmatpush2.msra.mxu0 0.0
    %506 = vmatprep.subr.mxu0 0.0
    %507 = vmatpush2.msra.mxu0 0.0
    %508 = vmatprep.subr.mxu0 0.0
    %509 = vmatpush2.msra.mxu0 0.0
    %510 = vmatprep.subr.mxu0 0.0
    %511 = vmatpush2.msra.mxu0 0.0
    %512 = vmatprep.subr.mxu0 0.0
    %513 = vmatpush2.msra.mxu0 0.0
    %514 = vmatprep.subr.mxu0 0.0
    %515 = vmatpush2.msra.mxu0 0.0
    %516 = vmatprep.subr.mxu0 0.0
    %517 = vmatpush2.msra.mxu0 0.0
    %518 = vmatprep.subr.mxu0 0.0
    %519 = vmatpush2.msra.mxu0 0.0
    %520 = vmatprep.subr.mxu0 0.0
    %521 = vmatpush2.msra.mxu0 0.0
    %522 = vmatprep.subr.mxu0 0.0
    %523 = vmatpush2.msra.mxu0 0.0
    %524 = vmatprep.subr.mxu0 0.0
    %525 = vmatpush2.msra.mxu0 0.0
    %526 = vmatprep.subr.mxu0 0.0
    %527 = vmatpush2.msra.mxu0 0.0
    %528 = vmatprep.subr.mxu0 0.0
    %529 = vmatpush2.msra.mxu0 0.0
    %530 = vmatprep.subr.mxu0 0.0
    %531 = vmatpush2.msra.mxu0 0.0
    %532 = vmatprep.mubr.f32.mxu0 0.0
    %533 = vmatmul.mubr.f32.gmra.mxu0 %v463
    %v534 = vpop.f32.mrf.mxu0
    %v535 = vadd.f32 0.0, %v534
    %v536 = vpop.f32.mrf.mxu0
    %537 = vmatprep.mubr.f32.mxu0 0.0
    %538 = vmatmul.mubr.f32.gmra.mxu0 %v466
    %v539 = vpop.f32.mrf.mxu0
    %v540 = vadd.f32 0.0, %v539
    %v541 = vpop.f32.mrf.mxu0
    %542 = vdwg.mxu0
    %v544 = vsel %vm56, %v34, 0
    %v547 = vsel %vm56, %v35, 0
    %549 = vmatprep.subr.mxu0 0.0
    %550 = vmatpush1.msra.mxu0 0.0
    %551 = vmatprep.subr.mxu0 0.0
    %552 = vmatpush1.msra.mxu0 0.0
    %553 = vmatprep.subr.mxu0 0.0
    %554 = vmatpush1.msra.mxu0 0.0
    %555 = vmatprep.subr.mxu0 0.0
    %556 = vmatpush1.msra.mxu0 0.0
    %557 = vmatprep.subr.mxu0 0.0
    %558 = vmatpush1.msra.mxu0 0.0
    %559 = vmatprep.subr.mxu0 0.0
    %560 = vmatpush1.msra.mxu0 0.0
    %561 = vmatprep.subr.mxu0 0.0
    %562 = vmatpush1.msra.mxu0 0.0
    %563 = vmatprep.subr.mxu0 0.0
    %564 = vmatpush1.msra.mxu0 0.0
    %565 = vmatprep.subr.mxu0 0.0
    %566 = vmatpush1.msra.mxu0 0.0
    %567 = vmatprep.subr.mxu0 0.0
    %568 = vmatpush1.msra.mxu0 0.0
    %569 = vmatprep.subr.mxu0 0.0
    %570 = vmatpush1.msra.mxu0 0.0
    %571 = vmatprep.subr.mxu0 0.0
    %572 = vmatpush1.msra.mxu0 0.0
    %573 = vmatprep.subr.mxu0 0.0
    %574 = vmatpush1.msra.mxu0 0.0
    %575 = vmatprep.subr.mxu0 0.0
    %576 = vmatpush1.msra.mxu0 0.0
    %577 = vmatprep.subr.mxu0 0.0
    %578 = vmatpush1.msra.mxu0 %v55
    %579 = vmatprep.subr.mxu0 0.0
    %580 = vmatpush1.msra.mxu0 %v54
    %581 = vmatprep.subr.mxu0 0.0
    %582 = vmatpush2.msra.mxu0 0.0
    %583 = vmatprep.subr.mxu0 0.0
    %584 = vmatpush2.msra.mxu0 0.0
    %585 = vmatprep.subr.mxu0 0.0
    %586 = vmatpush2.msra.mxu0 0.0
    %587 = vmatprep.subr.mxu0 0.0
    %588 = vmatpush2.msra.mxu0 0.0
    %589 = vmatprep.subr.mxu0 0.0
    %590 = vmatpush2.msra.mxu0 0.0
    %591 = vmatprep.subr.mxu0 0.0
    %592 = vmatpush2.msra.mxu0 0.0
    %593 = vmatprep.subr.mxu0 0.0
    %594 = vmatpush2.msra.mxu0 0.0
    %595 = vmatprep.subr.mxu0 0.0
    %596 = vmatpush2.msra.mxu0 0.0
    %597 = vmatprep.subr.mxu0 0.0
    %598 = vmatpush2.msra.mxu0 0.0
    %599 = vmatprep.subr.mxu0 0.0
    %600 = vmatpush2.msra.mxu0 0.0
    %601 = vmatprep.subr.mxu0 0.0
    %602 = vmatpush2.msra.mxu0 0.0
    %603 = vmatprep.subr.mxu0 0.0
    %604 = vmatpush2.msra.mxu0 0.0
    %605 = vmatprep.subr.mxu0 0.0
    %606 = vmatpush2.msra.mxu0 0.0
    %607 = vmatprep.subr.mxu0 0.0
    %608 = vmatpush2.msra.mxu0 0.0
    %609 = vmatprep.subr.mxu0 0.0
    %610 = vmatpush2.msra.mxu0 0.0
    %611 = vmatprep.subr.mxu0 0.0
    %612 = vmatpush2.msra.mxu0 0.0
    %613 = vmatprep.mubr.f32.mxu0 0.0
    %614 = vmatmul.mubr.f32.gmra.mxu0 %v544
    %v615 = vpop.f32.mrf.mxu0
    %v616 = vadd.f32 0.0, %v615
    %v617 = vpop.f32.mrf.mxu0
    %618 = vmatprep.mubr.f32.mxu0 0.0
    %619 = vmatmul.mubr.f32.gmra.mxu0 %v547
    %v620 = vpop.f32.mrf.mxu0
    %v621 = vadd.f32 0.0, %v620
    %v622 = vpop.f32.mrf.mxu0
    %623 = vdwg.mxu0
    %v625 = vsel %vm56, %v36, 0
    %v628 = vsel %vm56, %v37, 0
    %630 = vmatprep.subr.mxu0 0.0
    %631 = vmatpush1.msra.mxu0 0.0
    %632 = vmatprep.subr.mxu0 0.0
    %633 = vmatpush1.msra.mxu0 0.0
    %634 = vmatprep.subr.mxu0 0.0
    %635 = vmatpush1.msra.mxu0 0.0
    %636 = vmatprep.subr.mxu0 0.0
    %637 = vmatpush1.msra.mxu0 0.0
    %638 = vmatprep.subr.mxu0 0.0
    %639 = vmatpush1.msra.mxu0 0.0
    %640 = vmatprep.subr.mxu0 0.0
    %641 = vmatpush1.msra.mxu0 0.0
    %642 = vmatprep.subr.mxu0 0.0
    %643 = vmatpush1.msra.mxu0 0.0
    %644 = vmatprep.subr.mxu0 0.0
    %645 = vmatpush1.msra.mxu0 0.0
    %646 = vmatprep.subr.mxu0 0.0
    %647 = vmatpush1.msra.mxu0 0.0
    %648 = vmatprep.subr.mxu0 0.0
    %649 = vmatpush1.msra.mxu0 0.0
    %650 = vmatprep.subr.mxu0 0.0
    %651 = vmatpush1.msra.mxu0 0.0
    %652 = vmatprep.subr.mxu0 0.0
    %653 = vmatpush1.msra.mxu0 0.0
    %654 = vmatprep.subr.mxu0 0.0
    %655 = vmatpush1.msra.mxu0 0.0
    %656 = vmatprep.subr.mxu0 0.0
    %657 = vmatpush1.msra.mxu0 0.0
    %658 = vmatprep.subr.mxu0 0.0
    %659 = vmatpush1.msra.mxu0 %v55
    %660 = vmatprep.subr.mxu0 0.0
    %661 = vmatpush1.msra.mxu0 %v54
    %662 = vmatprep.subr.mxu0 0.0
    %663 = vmatpush2.msra.mxu0 0.0
    %664 = vmatprep.subr.mxu0 0.0
    %665 = vmatpush2.msra.mxu0 0.0
    %666 = vmatprep.subr.mxu0 0.0
    %667 = vmatpush2.msra.mxu0 0.0
    %668 = vmatprep.subr.mxu0 0.0
    %669 = vmatpush2.msra.mxu0 0.0
    %670 = vmatprep.subr.mxu0 0.0
    %671 = vmatpush2.msra.mxu0 0.0
    %672 = vmatprep.subr.mxu0 0.0
    %673 = vmatpush2.msra.mxu0 0.0
    %674 = vmatprep.subr.mxu0 0.0
    %675 = vmatpush2.msra.mxu0 0.0
    %676 = vmatprep.subr.mxu0 0.0
    %677 = vmatpush2.msra.mxu0 0.0
    %678 = vmatprep.subr.mxu0 0.0
    %679 = vmatpush2.msra.mxu0 0.0
    %680 = vmatprep.subr.mxu0 0.0
    %681 = vmatpush2.msra.mxu0 0.0
    %682 = vmatprep.subr.mxu0 0.0
    %683 = vmatpush2.msra.mxu0 0.0
    %684 = vmatprep.subr.mxu0 0.0
    %685 = vmatpush2.msra.mxu0 0.0
    %686 = vmatprep.subr.mxu0 0.0
    %687 = vmatpush2.msra.mxu0 0.0
    %688 = vmatprep.subr.mxu0 0.0
    %689 = vmatpush2.msra.mxu0 0.0
    %690 = vmatprep.subr.mxu0 0.0
    %691 = vmatpush2.msra.mxu0 0.0
    %692 = vmatprep.subr.mxu0 0.0
    %693 = vmatpush2.msra.mxu0 0.0
    %694 = vmatprep.mubr.f32.mxu0 0.0
    %695 = vmatmul.mubr.f32.gmra.mxu0 %v625
    %v696 = vpop.f32.mrf.mxu0
    %v697 = vadd.f32 0.0, %v696
    %v698 = vpop.f32.mrf.mxu0
    %699 = vmatprep.mubr.f32.mxu0 0.0
    %700 = vmatmul.mubr.f32.gmra.mxu0 %v628
    %v701 = vpop.f32.mrf.mxu0
    %v702 = vadd.f32 0.0, %v701
    %v703 = vpop.f32.mrf.mxu0
    %704 = vdwg.mxu0
    %v705 = vmul.u32 %v41, 2
    %v706 = vsub.s32 %v705, 1
    %vm707 = vcmp.ge.s32.totalorder %v39, %v706
    %v708 = vadd.s32 %v705, 1
    %vm709 = vcmp.le.s32.totalorder %v39, %v708
    %vm710 = vmand %vm707, %vm709
    %v711 = vsel %vm710, 1, 0
    %v712 = vcvt.s32.f32 %v711
    %v714 = vsel %vm56, %v712, 0
    %716 = vmatprep.subr.mxu0 0.0
    %717 = vmatpush1.msra.mxu0 0.0
    %718 = vmatprep.subr.mxu0 0.0
    %719 = vmatpush1.msra.mxu0 0.0
    %720 = vmatprep.subr.mxu0 0.0
    %721 = vmatpush1.msra.mxu0 0.0
    %722 = vmatprep.subr.mxu0 0.0
    %723 = vmatpush1.msra.mxu0 0.0
    %724 = vmatprep.subr.mxu0 0.0
    %725 = vmatpush1.msra.mxu0 0.0
    %726 = vmatprep.subr.mxu0 0.0
    %727 = vmatpush1.msra.mxu0 0.0
    %728 = vmatprep.subr.mxu0 0.0
    %729 = vmatpush1.msra.mxu0 0.0
    %730 = vmatprep.subr.mxu0 0.0
    %731 = vmatpush1.msra.mxu0 0.0
    %732 = vmatprep.subr.mxu0 0.0
    %733 = vmatpush1.msra.mxu0 0.0
    %734 = vmatprep.subr.mxu0 0.0
    %735 = vmatpush1.msra.mxu0 0.0
    %736 = vmatprep.subr.mxu0 0.0
    %737 = vmatpush1.msra.mxu0 0.0
    %738 = vmatprep.subr.mxu0 0.0
    %739 = vmatpush1.msra.mxu0 0.0
    %740 = vmatprep.subr.mxu0 0.0
    %741 = vmatpush1.msra.mxu0 0.0
    %742 = vmatprep.subr.mxu0 0.0
    %743 = vmatpush1.msra.mxu0 0.0
    %744 = vmatprep.subr.mxu0 0.0
    %745 = vmatpush1.msra.mxu0 %v135
    %746 = vmatprep.subr.mxu0 0.0
    %747 = vmatpush1.msra.mxu0 %v130
    %748 = vmatprep.subr.mxu0 0.0
    %749 = vmatpush2.msra.mxu0 0.0
    %750 = vmatprep.subr.mxu0 0.0
    %751 = vmatpush2.msra.mxu0 0.0
    %752 = vmatprep.subr.mxu0 0.0
    %753 = vmatpush2.msra.mxu0 0.0
    %754 = vmatprep.subr.mxu0 0.0
    %755 = vmatpush2.msra.mxu0 0.0
    %756 = vmatprep.subr.mxu0 0.0
    %757 = vmatpush2.msra.mxu0 0.0
    %758 = vmatprep.subr.mxu0 0.0
    %759 = vmatpush2.msra.mxu0 0.0
    %760 = vmatprep.subr.mxu0 0.0
    %761 = vmatpush2.msra.mxu0 0.0
    %762 = vmatprep.subr.mxu0 0.0
    %763 = vmatpush2.msra.mxu0 0.0
    %764 = vmatprep.subr.mxu0 0.0
    %765 = vmatpush2.msra.mxu0 0.0
    %766 = vmatprep.subr.mxu0 0.0
    %767 = vmatpush2.msra.mxu0 0.0
    %768 = vmatprep.subr.mxu0 0.0
    %769 = vmatpush2.msra.mxu0 0.0
    %770 = vmatprep.subr.mxu0 0.0
    %771 = vmatpush2.msra.mxu0 0.0
    %772 = vmatprep.subr.mxu0 0.0
    %773 = vmatpush2.msra.mxu0 0.0
    %774 = vmatprep.subr.mxu0 0.0
    %775 = vmatpush2.msra.mxu0 0.0
    %776 = vmatprep.subr.mxu0 0.0
    %777 = vmatpush2.msra.mxu0 0.0
    %778 = vmatprep.subr.mxu0 0.0
    %779 = vmatpush2.msra.mxu0 0.0
    %780 = vmatprep.mubr.f32.mxu0 0.0
    %781 = vmatmul.mubr.f32.gmra.mxu0 %v714
    %v782 = vpop.f32.mrf.mxu0
    %v783 = vadd.f32 0.0, %v782
    %v784 = vpop.f32.mrf.mxu0
    %785 = vdwg.mxu0
    %786 = vmatprep.subr.mxu0 0.0
    %787 = vmatpush1.msra.mxu0 0.0
    %788 = vmatprep.subr.mxu0 0.0
    %789 = vmatpush1.msra.mxu0 0.0
    %790 = vmatprep.subr.mxu0 0.0
    %791 = vmatpush1.msra.mxu0 0.0
    %792 = vmatprep.subr.mxu0 0.0
    %793 = vmatpush1.msra.mxu0 0.0
    %794 = vmatprep.subr.mxu0 0.0
    %795 = vmatpush1.msra.mxu0 0.0
    %796 = vmatprep.subr.mxu0 0.0
    %797 = vmatpush1.msra.mxu0 0.0
    %798 = vmatprep.subr.mxu0 0.0
    %799 = vmatpush1.msra.mxu0 0.0
    %800 = vmatprep.subr.mxu0 0.0
    %801 = vmatpush1.msra.mxu0 0.0
    %802 = vmatprep.subr.mxu0 0.0
    %803 = vmatpush1.msra.mxu0 0.0
    %804 = vmatprep.subr.mxu0 0.0
    %805 = vmatpush1.msra.mxu0 0.0
    %806 = vmatprep.subr.mxu0 0.0
    %807 = vmatpush1.msra.mxu0 0.0
    %808 = vmatprep.subr.mxu0 0.0
    %809 = vmatpush1.msra.mxu0 0.0
    %810 = vmatprep.subr.mxu0 0.0
    %811 = vmatpush1.msra.mxu0 0.0
    %812 = vmatprep.subr.mxu0 0.0
    %813 = vmatpush1.msra.mxu0 0.0
    %814 = vmatprep.subr.mxu0 0.0
    %815 = vmatpush1.msra.mxu0 %v216
    %816 = vmatprep.subr.mxu0 0.0
    %817 = vmatpush1.msra.mxu0 %v211
    %818 = vmatprep.subr.mxu0 0.0
    %819 = vmatpush2.msra.mxu0 0.0
    %820 = vmatprep.subr.mxu0 0.0
    %821 = vmatpush2.msra.mxu0 0.0
    %822 = vmatprep.subr.mxu0 0.0
    %823 = vmatpush2.msra.mxu0 0.0
    %824 = vmatprep.subr.mxu0 0.0
    %825 = vmatpush2.msra.mxu0 0.0
    %826 = vmatprep.subr.mxu0 0.0
    %827 = vmatpush2.msra.mxu0 0.0
    %828 = vmatprep.subr.mxu0 0.0
    %829 = vmatpush2.msra.mxu0 0.0
    %830 = vmatprep.subr.mxu0 0.0
    %831 = vmatpush2.msra.mxu0 0.0
    %832 = vmatprep.subr.mxu0 0.0
    %833 = vmatpush2.msra.mxu0 0.0
    %834 = vmatprep.subr.mxu0 0.0
    %835 = vmatpush2.msra.mxu0 0.0
    %836 = vmatprep.subr.mxu0 0.0
    %837 = vmatpush2.msra.mxu0 0.0
    %838 = vmatprep.subr.mxu0 0.0
    %839 = vmatpush2.msra.mxu0 0.0
    %840 = vmatprep.subr.mxu0 0.0
    %841 = vmatpush2.msra.mxu0 0.0
    %842 = vmatprep.subr.mxu0 0.0
    %843 = vmatpush2.msra.mxu0 0.0
    %844 = vmatprep.subr.mxu0 0.0
    %845 = vmatpush2.msra.mxu0 0.0
    %846 = vmatprep.subr.mxu0 0.0
    %847 = vmatpush2.msra.mxu0 0.0
    %848 = vmatprep.subr.mxu0 0.0
    %849 = vmatpush2.msra.mxu0 0.0
    %850 = vmatprep.mubr.f32.mxu0 0.0
    %851 = vmatmul.mubr.f32.gmra.mxu0 %v714
    %v852 = vpop.f32.mrf.mxu0
    %v853 = vadd.f32 0.0, %v852
    %v854 = vpop.f32.mrf.mxu0
    %855 = vdwg.mxu0
    %856 = vmatprep.subr.mxu0 0.0
    %857 = vmatpush1.msra.mxu0 0.0
    %858 = vmatprep.subr.mxu0 0.0
    %859 = vmatpush1.msra.mxu0 0.0
    %860 = vmatprep.subr.mxu0 0.0
    %861 = vmatpush1.msra.mxu0 0.0
    %862 = vmatprep.subr.mxu0 0.0
    %863 = vmatpush1.msra.mxu0 0.0
    %864 = vmatprep.subr.mxu0 0.0
    %865 = vmatpush1.msra.mxu0 0.0
    %866 = vmatprep.subr.mxu0 0.0
    %867 = vmatpush1.msra.mxu0 0.0
    %868 = vmatprep.subr.mxu0 0.0
    %869 = vmatpush1.msra.mxu0 0.0
    %870 = vmatprep.subr.mxu0 0.0
    %871 = vmatpush1.msra.mxu0 0.0
    %872 = vmatprep.subr.mxu0 0.0
    %873 = vmatpush1.msra.mxu0 0.0
    %874 = vmatprep.subr.mxu0 0.0
    %875 = vmatpush1.msra.mxu0 0.0
    %876 = vmatprep.subr.mxu0 0.0
    %877 = vmatpush1.msra.mxu0 0.0
    %878 = vmatprep.subr.mxu0 0.0
    %879 = vmatpush1.msra.mxu0 0.0
    %880 = vmatprep.subr.mxu0 0.0
    %881 = vmatpush1.msra.mxu0 0.0
    %882 = vmatprep.subr.mxu0 0.0
    %883 = vmatpush1.msra.mxu0 0.0
    %884 = vmatprep.subr.mxu0 0.0
    %885 = vmatpush1.msra.mxu0 %v297
    %886 = vmatprep.subr.mxu0 0.0
    %887 = vmatpush1.msra.mxu0 %v292
    %888 = vmatprep.subr.mxu0 0.0
    %889 = vmatpush2.msra.mxu0 0.0
    %890 = vmatprep.subr.mxu0 0.0
    %891 = vmatpush2.msra.mxu0 0.0
    %892 = vmatprep.subr.mxu0 0.0
    %893 = vmatpush2.msra.mxu0 0.0
    %894 = vmatprep.subr.mxu0 0.0
    %895 = vmatpush2.msra.mxu0 0.0
    %896 = vmatprep.subr.mxu0 0.0
    %897 = vmatpush2.msra.mxu0 0.0
    %898 = vmatprep.subr.mxu0 0.0
    %899 = vmatpush2.msra.mxu0 0.0
    %900 = vmatprep.subr.mxu0 0.0
    %901 = vmatpush2.msra.mxu0 0.0
    %902 = vmatprep.subr.mxu0 0.0
    %903 = vmatpush2.msra.mxu0 0.0
    %904 = vmatprep.subr.mxu0 0.0
    %905 = vmatpush2.msra.mxu0 0.0
    %906 = vmatprep.subr.mxu0 0.0
    %907 = vmatpush2.msra.mxu0 0.0
    %908 = vmatprep.subr.mxu0 0.0
    %909 = vmatpush2.msra.mxu0 0.0
    %910 = vmatprep.subr.mxu0 0.0
    %911 = vmatpush2.msra.mxu0 0.0
    %912 = vmatprep.subr.mxu0 0.0
    %913 = vmatpush2.msra.mxu0 0.0
    %914 = vmatprep.subr.mxu0 0.0
    %915 = vmatpush2.msra.mxu0 0.0
    %916 = vmatprep.subr.mxu0 0.0
    %917 = vmatpush2.msra.mxu0 0.0
    %918 = vmatprep.subr.mxu0 0.0
    %919 = vmatpush2.msra.mxu0 0.0
    %920 = vmatprep.mubr.f32.mxu0 0.0
    %921 = vmatmul.mubr.f32.gmra.mxu0 %v714
    %v922 = vpop.f32.mrf.mxu0
    %v923 = vadd.f32 0.0, %v922
    %v924 = vpop.f32.mrf.mxu0
    %925 = vdwg.mxu0
    %926 = vmatprep.subr.mxu0 0.0
    %927 = vmatpush1.msra.mxu0 0.0
    %928 = vmatprep.subr.mxu0 0.0
    %929 = vmatpush1.msra.mxu0 0.0
    %930 = vmatprep.subr.mxu0 0.0
    %931 = vmatpush1.msra.mxu0 0.0
    %932 = vmatprep.subr.mxu0 0.0
    %933 = vmatpush1.msra.mxu0 0.0
    %934 = vmatprep.subr.mxu0 0.0
    %935 = vmatpush1.msra.mxu0 0.0
    %936 = vmatprep.subr.mxu0 0.0
    %937 = vmatpush1.msra.mxu0 0.0
    %938 = vmatprep.subr.mxu0 0.0
    %939 = vmatpush1.msra.mxu0 0.0
    %940 = vmatprep.subr.mxu0 0.0
    %941 = vmatpush1.msra.mxu0 0.0
    %942 = vmatprep.subr.mxu0 0.0
    %943 = vmatpush1.msra.mxu0 0.0
    %944 = vmatprep.subr.mxu0 0.0
    %945 = vmatpush1.msra.mxu0 0.0
    %946 = vmatprep.subr.mxu0 0.0
    %947 = vmatpush1.msra.mxu0 0.0
    %948 = vmatprep.subr.mxu0 0.0
    %949 = vmatpush1.msra.mxu0 0.0
    %950 = vmatprep.subr.mxu0 0.0
    %951 = vmatpush1.msra.mxu0 0.0
    %952 = vmatprep.subr.mxu0 0.0
    %953 = vmatpush1.msra.mxu0 0.0
    %954 = vmatprep.subr.mxu0 0.0
    %955 = vmatpush1.msra.mxu0 %v378
    %956 = vmatprep.subr.mxu0 0.0
    %957 = vmatpush1.msra.mxu0 %v373
    %958 = vmatprep.subr.mxu0 0.0
    %959 = vmatpush2.msra.mxu0 0.0
    %960 = vmatprep.subr.mxu0 0.0
    %961 = vmatpush2.msra.mxu0 0.0
    %962 = vmatprep.subr.mxu0 0.0
    %963 = vmatpush2.msra.mxu0 0.0
    %964 = vmatprep.subr.mxu0 0.0
    %965 = vmatpush2.msra.mxu0 0.0
    %966 = vmatprep.subr.mxu0 0.0
    %967 = vmatpush2.msra.mxu0 0.0
    %968 = vmatprep.subr.mxu0 0.0
    %969 = vmatpush2.msra.mxu0 0.0
    %970 = vmatprep.subr.mxu0 0.0
    %971 = vmatpush2.msra.mxu0 0.0
    %972 = vmatprep.subr.mxu0 0.0
    %973 = vmatpush2.msra.mxu0 0.0
    %974 = vmatprep.subr.mxu0 0.0
    %975 = vmatpush2.msra.mxu0 0.0
    %976 = vmatprep.subr.mxu0 0.0
    %977 = vmatpush2.msra.mxu0 0.0
    %978 = vmatprep.subr.mxu0 0.0
    %979 = vmatpush2.msra.mxu0 0.0
    %980 = vmatprep.subr.mxu0 0.0
    %981 = vmatpush2.msra.mxu0 0.0
    %982 = vmatprep.subr.mxu0 0.0
    %983 = vmatpush2.msra.mxu0 0.0
    %984 = vmatprep.subr.mxu0 0.0
    %985 = vmatpush2.msra.mxu0 0.0
    %986 = vmatprep.subr.mxu0 0.0
    %987 = vmatpush2.msra.mxu0 0.0
    %988 = vmatprep.subr.mxu0 0.0
    %989 = vmatpush2.msra.mxu0 0.0
    %990 = vmatprep.mubr.f32.mxu0 0.0
    %991 = vmatmul.mubr.f32.gmra.mxu0 %v714
    %v992 = vpop.f32.mrf.mxu0
    %v993 = vadd.f32 0.0, %v992
    %v994 = vpop.f32.mrf.mxu0
    %995 = vdwg.mxu0
    %996 = vmatprep.subr.mxu0 0.0
    %997 = vmatpush1.msra.mxu0 0.0
    %998 = vmatprep.subr.mxu0 0.0
    %999 = vmatpush1.msra.mxu0 0.0
    %1000 = vmatprep.subr.mxu0 0.0
    %1001 = vmatpush1.msra.mxu0 0.0
    %1002 = vmatprep.subr.mxu0 0.0
    %1003 = vmatpush1.msra.mxu0 0.0
    %1004 = vmatprep.subr.mxu0 0.0
    %1005 = vmatpush1.msra.mxu0 0.0
    %1006 = vmatprep.subr.mxu0 0.0
    %1007 = vmatpush1.msra.mxu0 0.0
    %1008 = vmatprep.subr.mxu0 0.0
    %1009 = vmatpush1.msra.mxu0 0.0
    %1010 = vmatprep.subr.mxu0 0.0
    %1011 = vmatpush1.msra.mxu0 0.0
    %1012 = vmatprep.subr.mxu0 0.0
    %1013 = vmatpush1.msra.mxu0 0.0
    %1014 = vmatprep.subr.mxu0 0.0
    %1015 = vmatpush1.msra.mxu0 0.0
    %1016 = vmatprep.subr.mxu0 0.0
    %1017 = vmatpush1.msra.mxu0 0.0
    %1018 = vmatprep.subr.mxu0 0.0
    %1019 = vmatpush1.msra.mxu0 0.0
    %1020 = vmatprep.subr.mxu0 0.0
    %1021 = vmatpush1.msra.mxu0 0.0
    %1022 = vmatprep.subr.mxu0 0.0
    %1023 = vmatpush1.msra.mxu0 0.0
    %1024 = vmatprep.subr.mxu0 0.0
    %1025 = vmatpush1.msra.mxu0 %v459
    %1026 = vmatprep.subr.mxu0 0.0
    %1027 = vmatpush1.msra.mxu0 %v454
    %1028 = vmatprep.subr.mxu0 0.0
    %1029 = vmatpush2.msra.mxu0 0.0
    %1030 = vmatprep.subr.mxu0 0.0
    %1031 = vmatpush2.msra.mxu0 0.0
    %1032 = vmatprep.subr.mxu0 0.0
    %1033 = vmatpush2.msra.mxu0 0.0
    %1034 = vmatprep.subr.mxu0 0.0
    %1035 = vmatpush2.msra.mxu0 0.0
    %1036 = vmatprep.subr.mxu0 0.0
    %1037 = vmatpush2.msra.mxu0 0.0
    %1038 = vmatprep.subr.mxu0 0.0
    %1039 = vmatpush2.msra.mxu0 0.0
    %1040 = vmatprep.subr.mxu0 0.0
    %1041 = vmatpush2.msra.mxu0 0.0
    %1042 = vmatprep.subr.mxu0 0.0
    %1043 = vmatpush2.msra.mxu0 0.0
    %1044 = vmatprep.subr.mxu0 0.0
    %1045 = vmatpush2.msra.mxu0 0.0
    %1046 = vmatprep.subr.mxu0 0.0
    %1047 = vmatpush2.msra.mxu0 0.0
    %1048 = vmatprep.subr.mxu0 0.0
    %1049 = vmatpush2.msra.mxu0 0.0
    %1050 = vmatprep.subr.mxu0 0.0
    %1051 = vmatpush2.msra.mxu0 0.0
    %1052 = vmatprep.subr.mxu0 0.0
    %1053 = vmatpush2.msra.mxu0 0.0
    %1054 = vmatprep.subr.mxu0 0.0
    %1055 = vmatpush2.msra.mxu0 0.0
    %1056 = vmatprep.subr.mxu0 0.0
    %1057 = vmatpush2.msra.mxu0 0.0
    %1058 = vmatprep.subr.mxu0 0.0
    %1059 = vmatpush2.msra.mxu0 0.0
    %1060 = vmatprep.mubr.f32.mxu0 0.0
    %1061 = vmatmul.mubr.f32.gmra.mxu0 %v714
    %v1062 = vpop.f32.mrf.mxu0
    %v1063 = vadd.f32 0.0, %v1062
    %v1064 = vpop.f32.mrf.mxu0
    %1065 = vdwg.mxu0
    %1066 = vmatprep.subr.mxu0 0.0
    %1067 = vmatpush1.msra.mxu0 0.0
    %1068 = vmatprep.subr.mxu0 0.0
    %1069 = vmatpush1.msra.mxu0 0.0
    %1070 = vmatprep.subr.mxu0 0.0
    %1071 = vmatpush1.msra.mxu0 0.0
    %1072 = vmatprep.subr.mxu0 0.0
    %1073 = vmatpush1.msra.mxu0 0.0
    %1074 = vmatprep.subr.mxu0 0.0
    %1075 = vmatpush1.msra.mxu0 0.0
    %1076 = vmatprep.subr.mxu0 0.0
    %1077 = vmatpush1.msra.mxu0 0.0
    %1078 = vmatprep.subr.mxu0 0.0
    %1079 = vmatpush1.msra.mxu0 0.0
    %1080 = vmatprep.subr.mxu0 0.0
    %1081 = vmatpush1.msra.mxu0 0.0
    %1082 = vmatprep.subr.mxu0 0.0
    %1083 = vmatpush1.msra.mxu0 0.0
    %1084 = vmatprep.subr.mxu0 0.0
    %1085 = vmatpush1.msra.mxu0 0.0
    %1086 = vmatprep.subr.mxu0 0.0
    %1087 = vmatpush1.msra.mxu0 0.0
    %1088 = vmatprep.subr.mxu0 0.0
    %1089 = vmatpush1.msra.mxu0 0.0
    %1090 = vmatprep.subr.mxu0 0.0
    %1091 = vmatpush1.msra.mxu0 0.0
    %1092 = vmatprep.subr.mxu0 0.0
    %1093 = vmatpush1.msra.mxu0 0.0
    %1094 = vmatprep.subr.mxu0 0.0
    %1095 = vmatpush1.msra.mxu0 %v540
    %1096 = vmatprep.subr.mxu0 0.0
    %1097 = vmatpush1.msra.mxu0 %v535
    %1098 = vmatprep.subr.mxu0 0.0
    %1099 = vmatpush2.msra.mxu0 0.0
    %1100 = vmatprep.subr.mxu0 0.0
    %1101 = vmatpush2.msra.mxu0 0.0
    %1102 = vmatprep.subr.mxu0 0.0
    %1103 = vmatpush2.msra.mxu0 0.0
    %1104 = vmatprep.subr.mxu0 0.0
    %1105 = vmatpush2.msra.mxu0 0.0
    %1106 = vmatprep.subr.mxu0 0.0
    %1107 = vmatpush2.msra.mxu0 0.0
    %1108 = vmatprep.subr.mxu0 0.0
    %1109 = vmatpush2.msra.mxu0 0.0
    %1110 = vmatprep.subr.mxu0 0.0
    %1111 = vmatpush2.msra.mxu0 0.0
    %1112 = vmatprep.subr.mxu0 0.0
    %1113 = vmatpush2.msra.mxu0 0.0
    %1114 = vmatprep.subr.mxu0 0.0
    %1115 = vmatpush2.msra.mxu0 0.0
    %1116 = vmatprep.subr.mxu0 0.0
    %1117 = vmatpush2.msra.mxu0 0.0
    %1118 = vmatprep.subr.mxu0 0.0
    %1119 = vmatpush2.msra.mxu0 0.0
    %1120 = vmatprep.subr.mxu0 0.0
    %1121 = vmatpush2.msra.mxu0 0.0
    %1122 = vmatprep.subr.mxu0 0.0
    %1123 = vmatpush2.msra.mxu0 0.0
    %1124 = vmatprep.subr.mxu0 0.0
    %1125 = vmatpush2.msra.mxu0 0.0
    %1126 = vmatprep.subr.mxu0 0.0
    %1127 = vmatpush2.msra.mxu0 0.0
    %1128 = vmatprep.subr.mxu0 0.0
    %1129 = vmatpush2.msra.mxu0 0.0
    %1130 = vmatprep.mubr.f32.mxu0 0.0
    %1131 = vmatmul.mubr.f32.gmra.mxu0 %v714
    %v1132 = vpop.f32.mrf.mxu0
    %v1133 = vadd.f32 0.0, %v1132
    %v1134 = vpop.f32.mrf.mxu0
    %1135 = vdwg.mxu0
    %1136 = vmatprep.subr.mxu0 0.0
    %1137 = vmatpush1.msra.mxu0 0.0
    %1138 = vmatprep.subr.mxu0 0.0
    %1139 = vmatpush1.msra.mxu0 0.0
    %1140 = vmatprep.subr.mxu0 0.0
    %1141 = vmatpush1.msra.mxu0 0.0
    %1142 = vmatprep.subr.mxu0 0.0
    %1143 = vmatpush1.msra.mxu0 0.0
    %1144 = vmatprep.subr.mxu0 0.0
    %1145 = vmatpush1.msra.mxu0 0.0
    %1146 = vmatprep.subr.mxu0 0.0
    %1147 = vmatpush1.msra.mxu0 0.0
    %1148 = vmatprep.subr.mxu0 0.0
    %1149 = vmatpush1.msra.mxu0 0.0
    %1150 = vmatprep.subr.mxu0 0.0
    %1151 = vmatpush1.msra.mxu0 0.0
    %1152 = vmatprep.subr.mxu0 0.0
    %1153 = vmatpush1.msra.mxu0 0.0
    %1154 = vmatprep.subr.mxu0 0.0
    %1155 = vmatpush1.msra.mxu0 0.0
    %1156 = vmatprep.subr.mxu0 0.0
    %1157 = vmatpush1.msra.mxu0 0.0
    %1158 = vmatprep.subr.mxu0 0.0
    %1159 = vmatpush1.msra.mxu0 0.0
    %1160 = vmatprep.subr.mxu0 0.0
    %1161 = vmatpush1.msra.mxu0 0.0
    %1162 = vmatprep.subr.mxu0 0.0
    %1163 = vmatpush1.msra.mxu0 0.0
    %1164 = vmatprep.subr.mxu0 0.0
    %1165 = vmatpush1.msra.mxu0 %v621
    %1166 = vmatprep.subr.mxu0 0.0
    %1167 = vmatpush1.msra.mxu0 %v616
    %1168 = vmatprep.subr.mxu0 0.0
    %1169 = vmatpush2.msra.mxu0 0.0
    %1170 = vmatprep.subr.mxu0 0.0
    %1171 = vmatpush2.msra.mxu0 0.0
    %1172 = vmatprep.subr.mxu0 0.0
    %1173 = vmatpush2.msra.mxu0 0.0
    %1174 = vmatprep.subr.mxu0 0.0
    %1175 = vmatpush2.msra.mxu0 0.0
    %1176 = vmatprep.subr.mxu0 0.0
    %1177 = vmatpush2.msra.mxu0 0.0
    %1178 = vmatprep.subr.mxu0 0.0
    %1179 = vmatpush2.msra.mxu0 0.0
    %1180 = vmatprep.subr.mxu0 0.0
    %1181 = vmatpush2.msra.mxu0 0.0
    %1182 = vmatprep.subr.mxu0 0.0
    %1183 = vmatpush2.msra.mxu0 0.0
    %1184 = vmatprep.subr.mxu0 0.0
    %1185 = vmatpush2.msra.mxu0 0.0
    %1186 = vmatprep.subr.mxu0 0.0
    %1187 = vmatpush2.msra.mxu0 0.0
    %1188 = vmatprep.subr.mxu0 0.0
    %1189 = vmatpush2.msra.mxu0 0.0
    %1190 = vmatprep.subr.mxu0 0.0
    %1191 = vmatpush2.msra.mxu0 0.0
    %1192 = vmatprep.subr.mxu0 0.0
    %1193 = vmatpush2.msra.mxu0 0.0
    %1194 = vmatprep.subr.mxu0 0.0
    %1195 = vmatpush2.msra.mxu0 0.0
    %1196 = vmatprep.subr.mxu0 0.0
    %1197 = vmatpush2.msra.mxu0 0.0
    %1198 = vmatprep.subr.mxu0 0.0
    %1199 = vmatpush2.msra.mxu0 0.0
    %1200 = vmatprep.mubr.f32.mxu0 0.0
    %1201 = vmatmul.mubr.f32.gmra.mxu0 %v714
    %v1202 = vpop.f32.mrf.mxu0
    %v1203 = vadd.f32 0.0, %v1202
    %v1204 = vpop.f32.mrf.mxu0
    %1205 = vdwg.mxu0
    %1206 = vmatprep.subr.mxu0 0.0
    %1207 = vmatpush1.msra.mxu0 0.0
    %1208 = vmatprep.subr.mxu0 0.0
    %1209 = vmatpush1.msra.mxu0 0.0
    %1210 = vmatprep.subr.mxu0 0.0
    %1211 = vmatpush1.msra.mxu0 0.0
    %1212 = vmatprep.subr.mxu0 0.0
    %1213 = vmatpush1.msra.mxu0 0.0
    %1214 = vmatprep.subr.mxu0 0.0
    %1215 = vmatpush1.msra.mxu0 0.0
    %1216 = vmatprep.subr.mxu0 0.0
    %1217 = vmatpush1.msra.mxu0 0.0
    %1218 = vmatprep.subr.mxu0 0.0
    %1219 = vmatpush1.msra.mxu0 0.0
    %1220 = vmatprep.subr.mxu0 0.0
    %1221 = vmatpush1.msra.mxu0 0.0
    %1222 = vmatprep.subr.mxu0 0.0
    %1223 = vmatpush1.msra.mxu0 0.0
    %1224 = vmatprep.subr.mxu0 0.0
    %1225 = vmatpush1.msra.mxu0 0.0
    %1226 = vmatprep.subr.mxu0 0.0
    %1227 = vmatpush1.msra.mxu0 0.0
    %1228 = vmatprep.subr.mxu0 0.0
    %1229 = vmatpush1.msra.mxu0 0.0
    %1230 = vmatprep.subr.mxu0 0.0
    %1231 = vmatpush1.msra.mxu0 0.0
    %1232 = vmatprep.subr.mxu0 0.0
    %1233 = vmatpush1.msra.mxu0 0.0
    %1234 = vmatprep.subr.mxu0 0.0
    %1235 = vmatpush1.msra.mxu0 %v702
    %1236 = vmatprep.subr.mxu0 0.0
    %1237 = vmatpush1.msra.mxu0 %v697
    %1238 = vmatprep.subr.mxu0 0.0
    %1239 = vmatpush2.msra.mxu0 0.0
    %1240 = vmatprep.subr.mxu0 0.0
    %1241 = vmatpush2.msra.mxu0 0.0
    %1242 = vmatprep.subr.mxu0 0.0
    %1243 = vmatpush2.msra.mxu0 0.0
    %1244 = vmatprep.subr.mxu0 0.0
    %1245 = vmatpush2.msra.mxu0 0.0
    %1246 = vmatprep.subr.mxu0 0.0
    %1247 = vmatpush2.msra.mxu0 0.0
    %1248 = vmatprep.subr.mxu0 0.0
    %1249 = vmatpush2.msra.mxu0 0.0
    %1250 = vmatprep.subr.mxu0 0.0
    %1251 = vmatpush2.msra.mxu0 0.0
    %1252 = vmatprep.subr.mxu0 0.0
    %1253 = vmatpush2.msra.mxu0 0.0
    %1254 = vmatprep.subr.mxu0 0.0
    %1255 = vmatpush2.msra.mxu0 0.0
    %1256 = vmatprep.subr.mxu0 0.0
    %1257 = vmatpush2.msra.mxu0 0.0
    %1258 = vmatprep.subr.mxu0 0.0
    %1259 = vmatpush2.msra.mxu0 0.0
    %1260 = vmatprep.subr.mxu0 0.0
    %1261 = vmatpush2.msra.mxu0 0.0
    %1262 = vmatprep.subr.mxu0 0.0
    %1263 = vmatpush2.msra.mxu0 0.0
    %1264 = vmatprep.subr.mxu0 0.0
    %1265 = vmatpush2.msra.mxu0 0.0
    %1266 = vmatprep.subr.mxu0 0.0
    %1267 = vmatpush2.msra.mxu0 0.0
    %1268 = vmatprep.subr.mxu0 0.0
    %1269 = vmatpush2.msra.mxu0 0.0
    %1270 = vmatprep.mubr.f32.mxu0 0.0
    %1271 = vmatmul.mubr.f32.gmra.mxu0 %v714
    %v1272 = vpop.f32.mrf.mxu0
    %v1273 = vadd.f32 0.0, %v1272
    %v1274 = vpop.f32.mrf.mxu0
    %1275 = vdwg.mxu0
    %vm1276 = vcmask 64512
    %v1278 = vsel %vm1276, %v783, 0
    %1280 = vmatprep.subr.mxu0 0.0
    %1281 = vmatpush1.msra.mxu0 0.0
    %1282 = vmatprep.subr.mxu0 0.0
    %1283 = vmatpush1.msra.mxu0 0.0
    %1284 = vmatprep.subr.mxu0 0.0
    %1285 = vmatpush1.msra.mxu0 0.0
    %1286 = vmatprep.subr.mxu0 0.0
    %1287 = vmatpush1.msra.mxu0 0.0
    %1288 = vmatprep.subr.mxu0 0.0
    %1289 = vmatpush1.msra.mxu0 0.0
    %1290 = vmatprep.subr.mxu0 0.0
    %1291 = vmatpush1.msra.mxu0 0.0
    %1292 = vmatprep.subr.mxu0 0.0
    %1293 = vmatpush1.msra.mxu0 0.0
    %1294 = vmatprep.subr.mxu0 0.0
    %1295 = vmatpush1.msra.mxu0 0.0
    %1296 = vmatprep.subr.mxu0 0.0
    %1297 = vmatpush1.msra.mxu0 0.0
    %1298 = vmatprep.subr.mxu0 0.0
    %1299 = vmatpush1.msra.mxu0 0.0
    %1300 = vmatprep.subr.mxu0 0.0
    %1301 = vmatpush1.msra.mxu0 0.0
    %1302 = vmatprep.subr.mxu0 0.0
    %1303 = vmatpush1.msra.mxu0 0.0
    %1304 = vmatprep.subr.mxu0 0.0
    %1305 = vmatpush1.msra.mxu0 0.0
    %1306 = vmatprep.subr.mxu0 0.0
    %1307 = vmatpush1.msra.mxu0 0.0
    %1308 = vmatprep.subr.mxu0 0.0
    %1309 = vmatpush1.msra.mxu0 0.0
    %1310 = vmatprep.subr.mxu0 0.0
    %1311 = vmatpush1.msra.mxu0 %v54
    %1312 = vmatprep.subr.mxu0 0.0
    %1313 = vmatpush2.msra.mxu0 0.0
    %1314 = vmatprep.subr.mxu0 0.0
    %1315 = vmatpush2.msra.mxu0 0.0
    %1316 = vmatprep.subr.mxu0 0.0
    %1317 = vmatpush2.msra.mxu0 0.0
    %1318 = vmatprep.subr.mxu0 0.0
    %1319 = vmatpush2.msra.mxu0 0.0
    %1320 = vmatprep.subr.mxu0 0.0
    %1321 = vmatpush2.msra.mxu0 0.0
    %1322 = vmatprep.subr.mxu0 0.0
    %1323 = vmatpush2.msra.mxu0 0.0
    %1324 = vmatprep.subr.mxu0 0.0
    %1325 = vmatpush2.msra.mxu0 0.0
    %1326 = vmatprep.subr.mxu0 0.0
    %1327 = vmatpush2.msra.mxu0 0.0
    %1328 = vmatprep.subr.mxu0 0.0
    %1329 = vmatpush2.msra.mxu0 0.0
    %1330 = vmatprep.subr.mxu0 0.0
    %1331 = vmatpush2.msra.mxu0 0.0
    %1332 = vmatprep.subr.mxu0 0.0
    %1333 = vmatpush2.msra.mxu0 0.0
    %1334 = vmatprep.subr.mxu0 0.0
    %1335 = vmatpush2.msra.mxu0 0.0
    %1336 = vmatprep.subr.mxu0 0.0
    %1337 = vmatpush2.msra.mxu0 0.0
    %1338 = vmatprep.subr.mxu0 0.0
    %1339 = vmatpush2.msra.mxu0 0.0
    %1340 = vmatprep.subr.mxu0 0.0
    %1341 = vmatpush2.msra.mxu0 0.0
    %1342 = vmatprep.subr.mxu0 0.0
    %1343 = vmatpush2.msra.mxu0 0.0
    %1344 = vmatprep.mubr.f32.mxu0 0.0
    %1345 = vmatmul.mubr.f32.gmra.mxu0 %v1278
    %v1346 = vpop.f32.mrf.mxu0
    %v1347 = vadd.f32 0.0, %v1346
    %v1348 = vpop.f32.mrf.mxu0
    %1349 = vdwg.mxu0
    %v1351 = vsel %vm1276, %v853, 0
    %1353 = vmatprep.subr.mxu0 0.0
    %1354 = vmatpush1.msra.mxu0 0.0
    %1355 = vmatprep.subr.mxu0 0.0
    %1356 = vmatpush1.msra.mxu0 0.0
    %1357 = vmatprep.subr.mxu0 0.0
    %1358 = vmatpush1.msra.mxu0 0.0
    %1359 = vmatprep.subr.mxu0 0.0
    %1360 = vmatpush1.msra.mxu0 0.0
    %1361 = vmatprep.subr.mxu0 0.0
    %1362 = vmatpush1.msra.mxu0 0.0
    %1363 = vmatprep.subr.mxu0 0.0
    %1364 = vmatpush1.msra.mxu0 0.0
    %1365 = vmatprep.subr.mxu0 0.0
    %1366 = vmatpush1.msra.mxu0 0.0
    %1367 = vmatprep.subr.mxu0 0.0
    %1368 = vmatpush1.msra.mxu0 0.0
    %1369 = vmatprep.subr.mxu0 0.0
    %1370 = vmatpush1.msra.mxu0 0.0
    %1371 = vmatprep.subr.mxu0 0.0
    %1372 = vmatpush1.msra.mxu0 0.0
    %1373 = vmatprep.subr.mxu0 0.0
    %1374 = vmatpush1.msra.mxu0 0.0
    %1375 = vmatprep.subr.mxu0 0.0
    %1376 = vmatpush1.msra.mxu0 0.0
    %1377 = vmatprep.subr.mxu0 0.0
    %1378 = vmatpush1.msra.mxu0 0.0
    %1379 = vmatprep.subr.mxu0 0.0
    %1380 = vmatpush1.msra.mxu0 0.0
    %1381 = vmatprep.subr.mxu0 0.0
    %1382 = vmatpush1.msra.mxu0 0.0
    %1383 = vmatprep.subr.mxu0 0.0
    %1384 = vmatpush1.msra.mxu0 %v54
    %1385 = vmatprep.subr.mxu0 0.0
    %1386 = vmatpush2.msra.mxu0 0.0
    %1387 = vmatprep.subr.mxu0 0.0
    %1388 = vmatpush2.msra.mxu0 0.0
    %1389 = vmatprep.subr.mxu0 0.0
    %1390 = vmatpush2.msra.mxu0 0.0
    %1391 = vmatprep.subr.mxu0 0.0
    %1392 = vmatpush2.msra.mxu0 0.0
    %1393 = vmatprep.subr.mxu0 0.0
    %1394 = vmatpush2.msra.mxu0 0.0
    %1395 = vmatprep.subr.mxu0 0.0
    %1396 = vmatpush2.msra.mxu0 0.0
    %1397 = vmatprep.subr.mxu0 0.0
    %1398 = vmatpush2.msra.mxu0 0.0
    %1399 = vmatprep.subr.mxu0 0.0
    %1400 = vmatpush2.msra.mxu0 0.0
    %1401 = vmatprep.subr.mxu0 0.0
    %1402 = vmatpush2.msra.mxu0 0.0
    %1403 = vmatprep.subr.mxu0 0.0
    %1404 = vmatpush2.msra.mxu0 0.0
    %1405 = vmatprep.subr.mxu0 0.0
    %1406 = vmatpush2.msra.mxu0 0.0
    %1407 = vmatprep.subr.mxu0 0.0
    %1408 = vmatpush2.msra.mxu0 0.0
    %1409 = vmatprep.subr.mxu0 0.0
    %1410 = vmatpush2.msra.mxu0 0.0
    %1411 = vmatprep.subr.mxu0 0.0
    %1412 = vmatpush2.msra.mxu0 0.0
    %1413 = vmatprep.subr.mxu0 0.0
    %1414 = vmatpush2.msra.mxu0 0.0
    %1415 = vmatprep.subr.mxu0 0.0
    %1416 = vmatpush2.msra.mxu0 0.0
    %1417 = vmatprep.mubr.f32.mxu0 0.0
    %1418 = vmatmul.mubr.f32.gmra.mxu0 %v1351
    %v1419 = vpop.f32.mrf.mxu0
    %v1420 = vadd.f32 0.0, %v1419
    %v1421 = vpop.f32.mrf.mxu0
    %1422 = vdwg.mxu0
    %v1424 = vsel %vm1276, %v923, 0
    %1426 = vmatprep.subr.mxu0 0.0
    %1427 = vmatpush1.msra.mxu0 0.0
    %1428 = vmatprep.subr.mxu0 0.0
    %1429 = vmatpush1.msra.mxu0 0.0
    %1430 = vmatprep.subr.mxu0 0.0
    %1431 = vmatpush1.msra.mxu0 0.0
    %1432 = vmatprep.subr.mxu0 0.0
    %1433 = vmatpush1.msra.mxu0 0.0
    %1434 = vmatprep.subr.mxu0 0.0
    %1435 = vmatpush1.msra.mxu0 0.0
    %1436 = vmatprep.subr.mxu0 0.0
    %1437 = vmatpush1.msra.mxu0 0.0
    %1438 = vmatprep.subr.mxu0 0.0
    %1439 = vmatpush1.msra.mxu0 0.0
    %1440 = vmatprep.subr.mxu0 0.0
    %1441 = vmatpush1.msra.mxu0 0.0
    %1442 = vmatprep.subr.mxu0 0.0
    %1443 = vmatpush1.msra.mxu0 0.0
    %1444 = vmatprep.subr.mxu0 0.0
    %1445 = vmatpush1.msra.mxu0 0.0
    %1446 = vmatprep.subr.mxu0 0.0
    %1447 = vmatpush1.msra.mxu0 0.0
    %1448 = vmatprep.subr.mxu0 0.0
    %1449 = vmatpush1.msra.mxu0 0.0
    %1450 = vmatprep.subr.mxu0 0.0
    %1451 = vmatpush1.msra.mxu0 0.0
    %1452 = vmatprep.subr.mxu0 0.0
    %1453 = vmatpush1.msra.mxu0 0.0
    %1454 = vmatprep.subr.mxu0 0.0
    %1455 = vmatpush1.msra.mxu0 0.0
    %1456 = vmatprep.subr.mxu0 0.0
    %1457 = vmatpush1.msra.mxu0 %v54
    %1458 = vmatprep.subr.mxu0 0.0
    %1459 = vmatpush2.msra.mxu0 0.0
    %1460 = vmatprep.subr.mxu0 0.0
    %1461 = vmatpush2.msra.mxu0 0.0
    %1462 = vmatprep.subr.mxu0 0.0
    %1463 = vmatpush2.msra.mxu0 0.0
    %1464 = vmatprep.subr.mxu0 0.0
    %1465 = vmatpush2.msra.mxu0 0.0
    %1466 = vmatprep.subr.mxu0 0.0
    %1467 = vmatpush2.msra.mxu0 0.0
    %1468 = vmatprep.subr.mxu0 0.0
    %1469 = vmatpush2.msra.mxu0 0.0
    %1470 = vmatprep.subr.mxu0 0.0
    %1471 = vmatpush2.msra.mxu0 0.0
    %1472 = vmatprep.subr.mxu0 0.0
    %1473 = vmatpush2.msra.mxu0 0.0
    %1474 = vmatprep.subr.mxu0 0.0
    %1475 = vmatpush2.msra.mxu0 0.0
    %1476 = vmatprep.subr.mxu0 0.0
    %1477 = vmatpush2.msra.mxu0 0.0
    %1478 = vmatprep.subr.mxu0 0.0
    %1479 = vmatpush2.msra.mxu0 0.0
    %1480 = vmatprep.subr.mxu0 0.0
    %1481 = vmatpush2.msra.mxu0 0.0
    %1482 = vmatprep.subr.mxu0 0.0
    %1483 = vmatpush2.msra.mxu0 0.0
    %1484 = vmatprep.subr.mxu0 0.0
    %1485 = vmatpush2.msra.mxu0 0.0
    %1486 = vmatprep.subr.mxu0 0.0
    %1487 = vmatpush2.msra.mxu0 0.0
    %1488 = vmatprep.subr.mxu0 0.0
    %1489 = vmatpush2.msra.mxu0 0.0
    %1490 = vmatprep.mubr.f32.mxu0 0.0
    %1491 = vmatmul.mubr.f32.gmra.mxu0 %v1424
    %v1492 = vpop.f32.mrf.mxu0
    %v1493 = vadd.f32 0.0, %v1492
    %v1494 = vpop.f32.mrf.mxu0
    %1495 = vdwg.mxu0
    %v1497 = vsel %vm1276, %v993, 0
    %1499 = vmatprep.subr.mxu0 0.0
    %1500 = vmatpush1.msra.mxu0 0.0
    %1501 = vmatprep.subr.mxu0 0.0
    %1502 = vmatpush1.msra.mxu0 0.0
    %1503 = vmatprep.subr.mxu0 0.0
    %1504 = vmatpush1.msra.mxu0 0.0
    %1505 = vmatprep.subr.mxu0 0.0
    %1506 = vmatpush1.msra.mxu0 0.0
    %1507 = vmatprep.subr.mxu0 0.0
    %1508 = vmatpush1.msra.mxu0 0.0
    %1509 = vmatprep.subr.mxu0 0.0
    %1510 = vmatpush1.msra.mxu0 0.0
    %1511 = vmatprep.subr.mxu0 0.0
    %1512 = vmatpush1.msra.mxu0 0.0
    %1513 = vmatprep.subr.mxu0 0.0
    %1514 = vmatpush1.msra.mxu0 0.0
    %1515 = vmatprep.subr.mxu0 0.0
    %1516 = vmatpush1.msra.mxu0 0.0
    %1517 = vmatprep.subr.mxu0 0.0
    %1518 = vmatpush1.msra.mxu0 0.0
    %1519 = vmatprep.subr.mxu0 0.0
    %1520 = vmatpush1.msra.mxu0 0.0
    %1521 = vmatprep.subr.mxu0 0.0
    %1522 = vmatpush1.msra.mxu0 0.0
    %1523 = vmatprep.subr.mxu0 0.0
    %1524 = vmatpush1.msra.mxu0 0.0
    %1525 = vmatprep.subr.mxu0 0.0
    %1526 = vmatpush1.msra.mxu0 0.0
    %1527 = vmatprep.subr.mxu0 0.0
    %1528 = vmatpush1.msra.mxu0 0.0
    %1529 = vmatprep.subr.mxu0 0.0
    %1530 = vmatpush1.msra.mxu0 %v54
    %1531 = vmatprep.subr.mxu0 0.0
    %1532 = vmatpush2.msra.mxu0 0.0
    %1533 = vmatprep.subr.mxu0 0.0
    %1534 = vmatpush2.msra.mxu0 0.0
    %1535 = vmatprep.subr.mxu0 0.0
    %1536 = vmatpush2.msra.mxu0 0.0
    %1537 = vmatprep.subr.mxu0 0.0
    %1538 = vmatpush2.msra.mxu0 0.0
    %1539 = vmatprep.subr.mxu0 0.0
    %1540 = vmatpush2.msra.mxu0 0.0
    %1541 = vmatprep.subr.mxu0 0.0
    %1542 = vmatpush2.msra.mxu0 0.0
    %1543 = vmatprep.subr.mxu0 0.0
    %1544 = vmatpush2.msra.mxu0 0.0
    %1545 = vmatprep.subr.mxu0 0.0
    %1546 = vmatpush2.msra.mxu0 0.0
    %1547 = vmatprep.subr.mxu0 0.0
    %1548 = vmatpush2.msra.mxu0 0.0
    %1549 = vmatprep.subr.mxu0 0.0
    %1550 = vmatpush2.msra.mxu0 0.0
    %1551 = vmatprep.subr.mxu0 0.0
    %1552 = vmatpush2.msra.mxu0 0.0
    %1553 = vmatprep.subr.mxu0 0.0
    %1554 = vmatpush2.msra.mxu0 0.0
    %1555 = vmatprep.subr.mxu0 0.0
    %1556 = vmatpush2.msra.mxu0 0.0
    %1557 = vmatprep.subr.mxu0 0.0
    %1558 = vmatpush2.msra.mxu0 0.0
    %1559 = vmatprep.subr.mxu0 0.0
    %1560 = vmatpush2.msra.mxu0 0.0
    %1561 = vmatprep.subr.mxu0 0.0
    %1562 = vmatpush2.msra.mxu0 0.0
    %1563 = vmatprep.mubr.f32.mxu0 0.0
    %1564 = vmatmul.mubr.f32.gmra.mxu0 %v1497
    %v1565 = vpop.f32.mrf.mxu0
    %v1566 = vadd.f32 0.0, %v1565
    %v1567 = vpop.f32.mrf.mxu0
    %1568 = vdwg.mxu0
    %v1570 = vsel %vm1276, %v1063, 0
    %1572 = vmatprep.subr.mxu0 0.0
    %1573 = vmatpush1.msra.mxu0 0.0
    %1574 = vmatprep.subr.mxu0 0.0
    %1575 = vmatpush1.msra.mxu0 0.0
    %1576 = vmatprep.subr.mxu0 0.0
    %1577 = vmatpush1.msra.mxu0 0.0
    %1578 = vmatprep.subr.mxu0 0.0
    %1579 = vmatpush1.msra.mxu0 0.0
    %1580 = vmatprep.subr.mxu0 0.0
    %1581 = vmatpush1.msra.mxu0 0.0
    %1582 = vmatprep.subr.mxu0 0.0
    %1583 = vmatpush1.msra.mxu0 0.0
    %1584 = vmatprep.subr.mxu0 0.0
    %1585 = vmatpush1.msra.mxu0 0.0
    %1586 = vmatprep.subr.mxu0 0.0
    %1587 = vmatpush1.msra.mxu0 0.0
    %1588 = vmatprep.subr.mxu0 0.0
    %1589 = vmatpush1.msra.mxu0 0.0
    %1590 = vmatprep.subr.mxu0 0.0
    %1591 = vmatpush1.msra.mxu0 0.0
    %1592 = vmatprep.subr.mxu0 0.0
    %1593 = vmatpush1.msra.mxu0 0.0
    %1594 = vmatprep.subr.mxu0 0.0
    %1595 = vmatpush1.msra.mxu0 0.0
    %1596 = vmatprep.subr.mxu0 0.0
    %1597 = vmatpush1.msra.mxu0 0.0
    %1598 = vmatprep.subr.mxu0 0.0
    %1599 = vmatpush1.msra.mxu0 0.0
    %1600 = vmatprep.subr.mxu0 0.0
    %1601 = vmatpush1.msra.mxu0 0.0
    %1602 = vmatprep.subr.mxu0 0.0
    %1603 = vmatpush1.msra.mxu0 %v54
    %1604 = vmatprep.subr.mxu0 0.0
    %1605 = vmatpush2.msra.mxu0 0.0
    %1606 = vmatprep.subr.mxu0 0.0
    %1607 = vmatpush2.msra.mxu0 0.0
    %1608 = vmatprep.subr.mxu0 0.0
    %1609 = vmatpush2.msra.mxu0 0.0
    %1610 = vmatprep.subr.mxu0 0.0
    %1611 = vmatpush2.msra.mxu0 0.0
    %1612 = vmatprep.subr.mxu0 0.0
    %1613 = vmatpush2.msra.mxu0 0.0
    %1614 = vmatprep.subr.mxu0 0.0
    %1615 = vmatpush2.msra.mxu0 0.0
    %1616 = vmatprep.subr.mxu0 0.0
    %1617 = vmatpush2.msra.mxu0 0.0
    %1618 = vmatprep.subr.mxu0 0.0
    %1619 = vmatpush2.msra.mxu0 0.0
    %1620 = vmatprep.subr.mxu0 0.0
    %1621 = vmatpush2.msra.mxu0 0.0
    %1622 = vmatprep.subr.mxu0 0.0
    %1623 = vmatpush2.msra.mxu0 0.0
    %1624 = vmatprep.subr.mxu0 0.0
    %1625 = vmatpush2.msra.mxu0 0.0
    %1626 = vmatprep.subr.mxu0 0.0
    %1627 = vmatpush2.msra.mxu0 0.0
    %1628 = vmatprep.subr.mxu0 0.0
    %1629 = vmatpush2.msra.mxu0 0.0
    %1630 = vmatprep.subr.mxu0 0.0
    %1631 = vmatpush2.msra.mxu0 0.0
    %1632 = vmatprep.subr.mxu0 0.0
    %1633 = vmatpush2.msra.mxu0 0.0
    %1634 = vmatprep.subr.mxu0 0.0
    %1635 = vmatpush2.msra.mxu0 0.0
    %1636 = vmatprep.mubr.f32.mxu0 0.0
    %1637 = vmatmul.mubr.f32.gmra.mxu0 %v1570
    %v1638 = vpop.f32.mrf.mxu0
    %v1639 = vadd.f32 0.0, %v1638
    %v1640 = vpop.f32.mrf.mxu0
    %1641 = vdwg.mxu0
    %v1643 = vsel %vm1276, %v1133, 0
    %1645 = vmatprep.subr.mxu0 0.0
    %1646 = vmatpush1.msra.mxu0 0.0
    %1647 = vmatprep.subr.mxu0 0.0
    %1648 = vmatpush1.msra.mxu0 0.0
    %1649 = vmatprep.subr.mxu0 0.0
    %1650 = vmatpush1.msra.mxu0 0.0
    %1651 = vmatprep.subr.mxu0 0.0
    %1652 = vmatpush1.msra.mxu0 0.0
    %1653 = vmatprep.subr.mxu0 0.0
    %1654 = vmatpush1.msra.mxu0 0.0
    %1655 = vmatprep.subr.mxu0 0.0
    %1656 = vmatpush1.msra.mxu0 0.0
    %1657 = vmatprep.subr.mxu0 0.0
    %1658 = vmatpush1.msra.mxu0 0.0
    %1659 = vmatprep.subr.mxu0 0.0
    %1660 = vmatpush1.msra.mxu0 0.0
    %1661 = vmatprep.subr.mxu0 0.0
    %1662 = vmatpush1.msra.mxu0 0.0
    %1663 = vmatprep.subr.mxu0 0.0
    %1664 = vmatpush1.msra.mxu0 0.0
    %1665 = vmatprep.subr.mxu0 0.0
    %1666 = vmatpush1.msra.mxu0 0.0
    %1667 = vmatprep.subr.mxu0 0.0
    %1668 = vmatpush1.msra.mxu0 0.0
    %1669 = vmatprep.subr.mxu0 0.0
    %1670 = vmatpush1.msra.mxu0 0.0
    %1671 = vmatprep.subr.mxu0 0.0
    %1672 = vmatpush1.msra.mxu0 0.0
    %1673 = vmatprep.subr.mxu0 0.0
    %1674 = vmatpush1.msra.mxu0 0.0
    %1675 = vmatprep.subr.mxu0 0.0
    %1676 = vmatpush1.msra.mxu0 %v54
    %1677 = vmatprep.subr.mxu0 0.0
    %1678 = vmatpush2.msra.mxu0 0.0
    %1679 = vmatprep.subr.mxu0 0.0
    %1680 = vmatpush2.msra.mxu0 0.0
    %1681 = vmatprep.subr.mxu0 0.0
    %1682 = vmatpush2.msra.mxu0 0.0
    %1683 = vmatprep.subr.mxu0 0.0
    %1684 = vmatpush2.msra.mxu0 0.0
    %1685 = vmatprep.subr.mxu0 0.0
    %1686 = vmatpush2.msra.mxu0 0.0
    %1687 = vmatprep.subr.mxu0 0.0
    %1688 = vmatpush2.msra.mxu0 0.0
    %1689 = vmatprep.subr.mxu0 0.0
    %1690 = vmatpush2.msra.mxu0 0.0
    %1691 = vmatprep.subr.mxu0 0.0
    %1692 = vmatpush2.msra.mxu0 0.0
    %1693 = vmatprep.subr.mxu0 0.0
    %1694 = vmatpush2.msra.mxu0 0.0
    %1695 = vmatprep.subr.mxu0 0.0
    %1696 = vmatpush2.msra.mxu0 0.0
    %1697 = vmatprep.subr.mxu0 0.0
    %1698 = vmatpush2.msra.mxu0 0.0
    %1699 = vmatprep.subr.mxu0 0.0
    %1700 = vmatpush2.msra.mxu0 0.0
    %1701 = vmatprep.subr.mxu0 0.0
    %1702 = vmatpush2.msra.mxu0 0.0
    %1703 = vmatprep.subr.mxu0 0.0
    %1704 = vmatpush2.msra.mxu0 0.0
    %1705 = vmatprep.subr.mxu0 0.0
    %1706 = vmatpush2.msra.mxu0 0.0
    %1707 = vmatprep.subr.mxu0 0.0
    %1708 = vmatpush2.msra.mxu0 0.0
    %1709 = vmatprep.mubr.f32.mxu0 0.0
    %1710 = vmatmul.mubr.f32.gmra.mxu0 %v1643
    %v1711 = vpop.f32.mrf.mxu0
    %v1712 = vadd.f32 0.0, %v1711
    %v1713 = vpop.f32.mrf.mxu0
    %1714 = vdwg.mxu0
    %v1716 = vsel %vm1276, %v1203, 0
    %1718 = vmatprep.subr.mxu0 0.0
    %1719 = vmatpush1.msra.mxu0 0.0
    %1720 = vmatprep.subr.mxu0 0.0
    %1721 = vmatpush1.msra.mxu0 0.0
    %1722 = vmatprep.subr.mxu0 0.0
    %1723 = vmatpush1.msra.mxu0 0.0
    %1724 = vmatprep.subr.mxu0 0.0
    %1725 = vmatpush1.msra.mxu0 0.0
    %1726 = vmatprep.subr.mxu0 0.0
    %1727 = vmatpush1.msra.mxu0 0.0
    %1728 = vmatprep.subr.mxu0 0.0
    %1729 = vmatpush1.msra.mxu0 0.0
    %1730 = vmatprep.subr.mxu0 0.0
    %1731 = vmatpush1.msra.mxu0 0.0
    %1732 = vmatprep.subr.mxu0 0.0
    %1733 = vmatpush1.msra.mxu0 0.0
    %1734 = vmatprep.subr.mxu0 0.0
    %1735 = vmatpush1.msra.mxu0 0.0
    %1736 = vmatprep.subr.mxu0 0.0
    %1737 = vmatpush1.msra.mxu0 0.0
    %1738 = vmatprep.subr.mxu0 0.0
    %1739 = vmatpush1.msra.mxu0 0.0
    %1740 = vmatprep.subr.mxu0 0.0
    %1741 = vmatpush1.msra.mxu0 0.0
    %1742 = vmatprep.subr.mxu0 0.0
    %1743 = vmatpush1.msra.mxu0 0.0
    %1744 = vmatprep.subr.mxu0 0.0
    %1745 = vmatpush1.msra.mxu0 0.0
    %1746 = vmatprep.subr.mxu0 0.0
    %1747 = vmatpush1.msra.mxu0 0.0
    %1748 = vmatprep.subr.mxu0 0.0
    %1749 = vmatpush1.msra.mxu0 %v54
    %1750 = vmatprep.subr.mxu0 0.0
    %1751 = vmatpush2.msra.mxu0 0.0
    %1752 = vmatprep.subr.mxu0 0.0
    %1753 = vmatpush2.msra.mxu0 0.0
    %1754 = vmatprep.subr.mxu0 0.0
    %1755 = vmatpush2.msra.mxu0 0.0
    %1756 = vmatprep.subr.mxu0 0.0
    %1757 = vmatpush2.msra.mxu0 0.0
    %1758 = vmatprep.subr.mxu0 0.0
    %1759 = vmatpush2.msra.mxu0 0.0
    %1760 = vmatprep.subr.mxu0 0.0
    %1761 = vmatpush2.msra.mxu0 0.0
    %1762 = vmatprep.subr.mxu0 0.0
    %1763 = vmatpush2.msra.mxu0 0.0
    %1764 = vmatprep.subr.mxu0 0.0
    %1765 = vmatpush2.msra.mxu0 0.0
    %1766 = vmatprep.subr.mxu0 0.0
    %1767 = vmatpush2.msra.mxu0 0.0
    %1768 = vmatprep.subr.mxu0 0.0
    %1769 = vmatpush2.msra.mxu0 0.0
    %1770 = vmatprep.subr.mxu0 0.0
    %1771 = vmatpush2.msra.mxu0 0.0
    %1772 = vmatprep.subr.mxu0 0.0
    %1773 = vmatpush2.msra.mxu0 0.0
    %1774 = vmatprep.subr.mxu0 0.0
    %1775 = vmatpush2.msra.mxu0 0.0
    %1776 = vmatprep.subr.mxu0 0.0
    %1777 = vmatpush2.msra.mxu0 0.0
    %1778 = vmatprep.subr.mxu0 0.0
    %1779 = vmatpush2.msra.mxu0 0.0
    %1780 = vmatprep.subr.mxu0 0.0
    %1781 = vmatpush2.msra.mxu0 0.0
    %1782 = vmatprep.mubr.f32.mxu0 0.0
    %1783 = vmatmul.mubr.f32.gmra.mxu0 %v1716
    %v1784 = vpop.f32.mrf.mxu0
    %v1785 = vadd.f32 0.0, %v1784
    %v1786 = vpop.f32.mrf.mxu0
    %1787 = vdwg.mxu0
    %v1789 = vsel %vm1276, %v1273, 0
    %1791 = vmatprep.subr.mxu0 0.0
    %1792 = vmatpush1.msra.mxu0 0.0
    %1793 = vmatprep.subr.mxu0 0.0
    %1794 = vmatpush1.msra.mxu0 0.0
    %1795 = vmatprep.subr.mxu0 0.0
    %1796 = vmatpush1.msra.mxu0 0.0
    %1797 = vmatprep.subr.mxu0 0.0
    %1798 = vmatpush1.msra.mxu0 0.0
    %1799 = vmatprep.subr.mxu0 0.0
    %1800 = vmatpush1.msra.mxu0 0.0
    %1801 = vmatprep.subr.mxu0 0.0
    %1802 = vmatpush1.msra.mxu0 0.0
    %1803 = vmatprep.subr.mxu0 0.0
    %1804 = vmatpush1.msra.mxu0 0.0
    %1805 = vmatprep.subr.mxu0 0.0
    %1806 = vmatpush1.msra.mxu0 0.0
    %1807 = vmatprep.subr.mxu0 0.0
    %1808 = vmatpush1.msra.mxu0 0.0
    %1809 = vmatprep.subr.mxu0 0.0
    %1810 = vmatpush1.msra.mxu0 0.0
    %1811 = vmatprep.subr.mxu0 0.0
    %1812 = vmatpush1.msra.mxu0 0.0
    %1813 = vmatprep.subr.mxu0 0.0
    %1814 = vmatpush1.msra.mxu0 0.0
    %1815 = vmatprep.subr.mxu0 0.0
    %1816 = vmatpush1.msra.mxu0 0.0
    %1817 = vmatprep.subr.mxu0 0.0
    %1818 = vmatpush1.msra.mxu0 0.0
    %1819 = vmatprep.subr.mxu0 0.0
    %1820 = vmatpush1.msra.mxu0 0.0
    %1821 = vmatprep.subr.mxu0 0.0
    %1822 = vmatpush1.msra.mxu0 %v54
    %1823 = vmatprep.subr.mxu0 0.0
    %1824 = vmatpush2.msra.mxu0 0.0
    %1825 = vmatprep.subr.mxu0 0.0
    %1826 = vmatpush2.msra.mxu0 0.0
    %1827 = vmatprep.subr.mxu0 0.0
    %1828 = vmatpush2.msra.mxu0 0.0
    %1829 = vmatprep.subr.mxu0 0.0
    %1830 = vmatpush2.msra.mxu0 0.0
    %1831 = vmatprep.subr.mxu0 0.0
    %1832 = vmatpush2.msra.mxu0 0.0
    %1833 = vmatprep.subr.mxu0 0.0
    %1834 = vmatpush2.msra.mxu0 0.0
    %1835 = vmatprep.subr.mxu0 0.0
    %1836 = vmatpush2.msra.mxu0 0.0
    %1837 = vmatprep.subr.mxu0 0.0
    %1838 = vmatpush2.msra.mxu0 0.0
    %1839 = vmatprep.subr.mxu0 0.0
    %1840 = vmatpush2.msra.mxu0 0.0
    %1841 = vmatprep.subr.mxu0 0.0
    %1842 = vmatpush2.msra.mxu0 0.0
    %1843 = vmatprep.subr.mxu0 0.0
    %1844 = vmatpush2.msra.mxu0 0.0
    %1845 = vmatprep.subr.mxu0 0.0
    %1846 = vmatpush2.msra.mxu0 0.0
    %1847 = vmatprep.subr.mxu0 0.0
    %1848 = vmatpush2.msra.mxu0 0.0
    %1849 = vmatprep.subr.mxu0 0.0
    %1850 = vmatpush2.msra.mxu0 0.0
    %1851 = vmatprep.subr.mxu0 0.0
    %1852 = vmatpush2.msra.mxu0 0.0
    %1853 = vmatprep.subr.mxu0 0.0
    %1854 = vmatpush2.msra.mxu0 0.0
    %1855 = vmatprep.mubr.f32.mxu0 0.0
    %1856 = vmatmul.mubr.f32.gmra.mxu0 %v1789
    %v1857 = vpop.f32.mrf.mxu0
    %v1858 = vadd.f32 0.0, %v1857
    %v1859 = vpop.f32.mrf.mxu0
    %1860 = vdwg.mxu0
    %v1861 = vsel %vm1276, %v712, 0
    %1863 = vmatprep.subr.mxu0 0.0
    %1864 = vmatpush1.msra.mxu0 0.0
    %1865 = vmatprep.subr.mxu0 0.0
    %1866 = vmatpush1.msra.mxu0 0.0
    %1867 = vmatprep.subr.mxu0 0.0
    %1868 = vmatpush1.msra.mxu0 0.0
    %1869 = vmatprep.subr.mxu0 0.0
    %1870 = vmatpush1.msra.mxu0 0.0
    %1871 = vmatprep.subr.mxu0 0.0
    %1872 = vmatpush1.msra.mxu0 0.0
    %1873 = vmatprep.subr.mxu0 0.0
    %1874 = vmatpush1.msra.mxu0 0.0
    %1875 = vmatprep.subr.mxu0 0.0
    %1876 = vmatpush1.msra.mxu0 0.0
    %1877 = vmatprep.subr.mxu0 0.0
    %1878 = vmatpush1.msra.mxu0 0.0
    %1879 = vmatprep.subr.mxu0 0.0
    %1880 = vmatpush1.msra.mxu0 0.0
    %1881 = vmatprep.subr.mxu0 0.0
    %1882 = vmatpush1.msra.mxu0 0.0
    %1883 = vmatprep.subr.mxu0 0.0
    %1884 = vmatpush1.msra.mxu0 0.0
    %1885 = vmatprep.subr.mxu0 0.0
    %1886 = vmatpush1.msra.mxu0 0.0
    %1887 = vmatprep.subr.mxu0 0.0
    %1888 = vmatpush1.msra.mxu0 0.0
    %1889 = vmatprep.subr.mxu0 0.0
    %1890 = vmatpush1.msra.mxu0 0.0
    %1891 = vmatprep.subr.mxu0 0.0
    %1892 = vmatpush1.msra.mxu0 0.0
    %1893 = vmatprep.subr.mxu0 0.0
    %1894 = vmatpush1.msra.mxu0 %v1347
    %1895 = vmatprep.subr.mxu0 0.0
    %1896 = vmatpush2.msra.mxu0 0.0
    %1897 = vmatprep.subr.mxu0 0.0
    %1898 = vmatpush2.msra.mxu0 0.0
    %1899 = vmatprep.subr.mxu0 0.0
    %1900 = vmatpush2.msra.mxu0 0.0
    %1901 = vmatprep.subr.mxu0 0.0
    %1902 = vmatpush2.msra.mxu0 0.0
    %1903 = vmatprep.subr.mxu0 0.0
    %1904 = vmatpush2.msra.mxu0 0.0
    %1905 = vmatprep.subr.mxu0 0.0
    %1906 = vmatpush2.msra.mxu0 0.0
    %1907 = vmatprep.subr.mxu0 0.0
    %1908 = vmatpush2.msra.mxu0 0.0
    %1909 = vmatprep.subr.mxu0 0.0
    %1910 = vmatpush2.msra.mxu0 0.0
    %1911 = vmatprep.subr.mxu0 0.0
    %1912 = vmatpush2.msra.mxu0 0.0
    %1913 = vmatprep.subr.mxu0 0.0
    %1914 = vmatpush2.msra.mxu0 0.0
    %1915 = vmatprep.subr.mxu0 0.0
    %1916 = vmatpush2.msra.mxu0 0.0
    %1917 = vmatprep.subr.mxu0 0.0
    %1918 = vmatpush2.msra.mxu0 0.0
    %1919 = vmatprep.subr.mxu0 0.0
    %1920 = vmatpush2.msra.mxu0 0.0
    %1921 = vmatprep.subr.mxu0 0.0
    %1922 = vmatpush2.msra.mxu0 0.0
    %1923 = vmatprep.subr.mxu0 0.0
    %1924 = vmatpush2.msra.mxu0 0.0
    %1925 = vmatprep.subr.mxu0 0.0
    %1926 = vmatpush2.msra.mxu0 0.0
    %1927 = vmatprep.mubr.f32.mxu0 0.0
    %1928 = vmatmul.mubr.f32.gmra.mxu0 %v1861
    %v1929 = vpop.f32.mrf.mxu0
    %v1930 = vadd.f32 0.0, %v1929
    %v1931 = vpop.f32.mrf.mxu0
    %1932 = vdwg.mxu0
    %1933 = vmatprep.subr.mxu0 0.0
    %1934 = vmatpush1.msra.mxu0 0.0
    %1935 = vmatprep.subr.mxu0 0.0
    %1936 = vmatpush1.msra.mxu0 0.0
    %1937 = vmatprep.subr.mxu0 0.0
    %1938 = vmatpush1.msra.mxu0 0.0
    %1939 = vmatprep.subr.mxu0 0.0
    %1940 = vmatpush1.msra.mxu0 0.0
    %1941 = vmatprep.subr.mxu0 0.0
    %1942 = vmatpush1.msra.mxu0 0.0
    %1943 = vmatprep.subr.mxu0 0.0
    %1944 = vmatpush1.msra.mxu0 0.0
    %1945 = vmatprep.subr.mxu0 0.0
    %1946 = vmatpush1.msra.mxu0 0.0
    %1947 = vmatprep.subr.mxu0 0.0
    %1948 = vmatpush1.msra.mxu0 0.0
    %1949 = vmatprep.subr.mxu0 0.0
    %1950 = vmatpush1.msra.mxu0 0.0
    %1951 = vmatprep.subr.mxu0 0.0
    %1952 = vmatpush1.msra.mxu0 0.0
    %1953 = vmatprep.subr.mxu0 0.0
    %1954 = vmatpush1.msra.mxu0 0.0
    %1955 = vmatprep.subr.mxu0 0.0
    %1956 = vmatpush1.msra.mxu0 0.0
    %1957 = vmatprep.subr.mxu0 0.0
    %1958 = vmatpush1.msra.mxu0 0.0
    %1959 = vmatprep.subr.mxu0 0.0
    %1960 = vmatpush1.msra.mxu0 0.0
    %1961 = vmatprep.subr.mxu0 0.0
    %1962 = vmatpush1.msra.mxu0 0.0
    %1963 = vmatprep.subr.mxu0 0.0
    %1964 = vmatpush1.msra.mxu0 %v1420
    %1965 = vmatprep.subr.mxu0 0.0
    %1966 = vmatpush2.msra.mxu0 0.0
    %1967 = vmatprep.subr.mxu0 0.0
    %1968 = vmatpush2.msra.mxu0 0.0
    %1969 = vmatprep.subr.mxu0 0.0
    %1970 = vmatpush2.msra.mxu0 0.0
    %1971 = vmatprep.subr.mxu0 0.0
    %1972 = vmatpush2.msra.mxu0 0.0
    %1973 = vmatprep.subr.mxu0 0.0
    %1974 = vmatpush2.msra.mxu0 0.0
    %1975 = vmatprep.subr.mxu0 0.0
    %1976 = vmatpush2.msra.mxu0 0.0
    %1977 = vmatprep.subr.mxu0 0.0
    %1978 = vmatpush2.msra.mxu0 0.0
    %1979 = vmatprep.subr.mxu0 0.0
    %1980 = vmatpush2.msra.mxu0 0.0
    %1981 = vmatprep.subr.mxu0 0.0
    %1982 = vmatpush2.msra.mxu0 0.0
    %1983 = vmatprep.subr.mxu0 0.0
    %1984 = vmatpush2.msra.mxu0 0.0
    %1985 = vmatprep.subr.mxu0 0.0
    %1986 = vmatpush2.msra.mxu0 0.0
    %1987 = vmatprep.subr.mxu0 0.0
    %1988 = vmatpush2.msra.mxu0 0.0
    %1989 = vmatprep.subr.mxu0 0.0
    %1990 = vmatpush2.msra.mxu0 0.0
    %1991 = vmatprep.subr.mxu0 0.0
    %1992 = vmatpush2.msra.mxu0 0.0
    %1993 = vmatprep.subr.mxu0 0.0
    %1994 = vmatpush2.msra.mxu0 0.0
    %1995 = vmatprep.subr.mxu0 0.0
    %1996 = vmatpush2.msra.mxu0 0.0
    %1997 = vmatprep.mubr.f32.mxu0 0.0
    %1998 = vmatmul.mubr.f32.gmra.mxu0 %v1861
    %v1999 = vpop.f32.mrf.mxu0
    %v2000 = vadd.f32 0.0, %v1999
    %v2001 = vpop.f32.mrf.mxu0
    %2002 = vdwg.mxu0
    %2003 = vmatprep.subr.mxu0 0.0
    %2004 = vmatpush1.msra.mxu0 0.0
    %2005 = vmatprep.subr.mxu0 0.0
    %2006 = vmatpush1.msra.mxu0 0.0
    %2007 = vmatprep.subr.mxu0 0.0
    %2008 = vmatpush1.msra.mxu0 0.0
    %2009 = vmatprep.subr.mxu0 0.0
    %2010 = vmatpush1.msra.mxu0 0.0
    %2011 = vmatprep.subr.mxu0 0.0
    %2012 = vmatpush1.msra.mxu0 0.0
    %2013 = vmatprep.subr.mxu0 0.0
    %2014 = vmatpush1.msra.mxu0 0.0
    %2015 = vmatprep.subr.mxu0 0.0
    %2016 = vmatpush1.msra.mxu0 0.0
    %2017 = vmatprep.subr.mxu0 0.0
    %2018 = vmatpush1.msra.mxu0 0.0
    %2019 = vmatprep.subr.mxu0 0.0
    %2020 = vmatpush1.msra.mxu0 0.0
    %2021 = vmatprep.subr.mxu0 0.0
    %2022 = vmatpush1.msra.mxu0 0.0
    %2023 = vmatprep.subr.mxu0 0.0
    %2024 = vmatpush1.msra.mxu0 0.0
    %2025 = vmatprep.subr.mxu0 0.0
    %2026 = vmatpush1.msra.mxu0 0.0
    %2027 = vmatprep.subr.mxu0 0.0
    %2028 = vmatpush1.msra.mxu0 0.0
    %2029 = vmatprep.subr.mxu0 0.0
    %2030 = vmatpush1.msra.mxu0 0.0
    %2031 = vmatprep.subr.mxu0 0.0
    %2032 = vmatpush1.msra.mxu0 0.0
    %2033 = vmatprep.subr.mxu0 0.0
    %2034 = vmatpush1.msra.mxu0 %v1493
    %2035 = vmatprep.subr.mxu0 0.0
    %2036 = vmatpush2.msra.mxu0 0.0
    %2037 = vmatprep.subr.mxu0 0.0
    %2038 = vmatpush2.msra.mxu0 0.0
    %2039 = vmatprep.subr.mxu0 0.0
    %2040 = vmatpush2.msra.mxu0 0.0
    %2041 = vmatprep.subr.mxu0 0.0
    %2042 = vmatpush2.msra.mxu0 0.0
    %2043 = vmatprep.subr.mxu0 0.0
    %2044 = vmatpush2.msra.mxu0 0.0
    %2045 = vmatprep.subr.mxu0 0.0
    %2046 = vmatpush2.msra.mxu0 0.0
    %2047 = vmatprep.subr.mxu0 0.0
    %2048 = vmatpush2.msra.mxu0 0.0
    %2049 = vmatprep.subr.mxu0 0.0
    %2050 = vmatpush2.msra.mxu0 0.0
    %2051 = vmatprep.subr.mxu0 0.0
    %2052 = vmatpush2.msra.mxu0 0.0
    %2053 = vmatprep.subr.mxu0 0.0
    %2054 = vmatpush2.msra.mxu0 0.0
    %2055 = vmatprep.subr.mxu0 0.0
    %2056 = vmatpush2.msra.mxu0 0.0
    %2057 = vmatprep.subr.mxu0 0.0
    %2058 = vmatpush2.msra.mxu0 0.0
    %2059 = vmatprep.subr.mxu0 0.0
    %2060 = vmatpush2.msra.mxu0 0.0
    %2061 = vmatprep.subr.mxu0 0.0
    %2062 = vmatpush2.msra.mxu0 0.0
    %2063 = vmatprep.subr.mxu0 0.0
    %2064 = vmatpush2.msra.mxu0 0.0
    %2065 = vmatprep.subr.mxu0 0.0
    %2066 = vmatpush2.msra.mxu0 0.0
    %2067 = vmatprep.mubr.f32.mxu0 0.0
    %2068 = vmatmul.mubr.f32.gmra.mxu0 %v1861
    %v2069 = vpop.f32.mrf.mxu0
    %v2070 = vadd.f32 0.0, %v2069
    %v2071 = vpop.f32.mrf.mxu0
    %2072 = vdwg.mxu0
    %2073 = vmatprep.subr.mxu0 0.0
    %2074 = vmatpush1.msra.mxu0 0.0
    %2075 = vmatprep.subr.mxu0 0.0
    %2076 = vmatpush1.msra.mxu0 0.0
    %2077 = vmatprep.subr.mxu0 0.0
    %2078 = vmatpush1.msra.mxu0 0.0
    %2079 = vmatprep.subr.mxu0 0.0
    %2080 = vmatpush1.msra.mxu0 0.0
    %2081 = vmatprep.subr.mxu0 0.0
    %2082 = vmatpush1.msra.mxu0 0.0
    %2083 = vmatprep.subr.mxu0 0.0
    %2084 = vmatpush1.msra.mxu0 0.0
    %2085 = vmatprep.subr.mxu0 0.0
    %2086 = vmatpush1.msra.mxu0 0.0
    %2087 = vmatprep.subr.mxu0 0.0
    %2088 = vmatpush1.msra.mxu0 0.0
    %2089 = vmatprep.subr.mxu0 0.0
    %2090 = vmatpush1.msra.mxu0 0.0
    %2091 = vmatprep.subr.mxu0 0.0
    %2092 = vmatpush1.msra.mxu0 0.0
    %2093 = vmatprep.subr.mxu0 0.0
    %2094 = vmatpush1.msra.mxu0 0.0
    %2095 = vmatprep.subr.mxu0 0.0
    %2096 = vmatpush1.msra.mxu0 0.0
    %2097 = vmatprep.subr.mxu0 0.0
    %2098 = vmatpush1.msra.mxu0 0.0
    %2099 = vmatprep.subr.mxu0 0.0
    %2100 = vmatpush1.msra.mxu0 0.0
    %2101 = vmatprep.subr.mxu0 0.0
    %2102 = vmatpush1.msra.mxu0 0.0
    %2103 = vmatprep.subr.mxu0 0.0
    %2104 = vmatpush1.msra.mxu0 %v1566
    %2105 = vmatprep.subr.mxu0 0.0
    %2106 = vmatpush2.msra.mxu0 0.0
    %2107 = vmatprep.subr.mxu0 0.0
    %2108 = vmatpush2.msra.mxu0 0.0
    %2109 = vmatprep.subr.mxu0 0.0
    %2110 = vmatpush2.msra.mxu0 0.0
    %2111 = vmatprep.subr.mxu0 0.0
    %2112 = vmatpush2.msra.mxu0 0.0
    %2113 = vmatprep.subr.mxu0 0.0
    %2114 = vmatpush2.msra.mxu0 0.0
    %2115 = vmatprep.subr.mxu0 0.0
    %2116 = vmatpush2.msra.mxu0 0.0
    %2117 = vmatprep.subr.mxu0 0.0
    %2118 = vmatpush2.msra.mxu0 0.0
    %2119 = vmatprep.subr.mxu0 0.0
    %2120 = vmatpush2.msra.mxu0 0.0
    %2121 = vmatprep.subr.mxu0 0.0
    %2122 = vmatpush2.msra.mxu0 0.0
    %2123 = vmatprep.subr.mxu0 0.0
    %2124 = vmatpush2.msra.mxu0 0.0
    %2125 = vmatprep.subr.mxu0 0.0
    %2126 = vmatpush2.msra.mxu0 0.0
    %2127 = vmatprep.subr.mxu0 0.0
    %2128 = vmatpush2.msra.mxu0 0.0
    %2129 = vmatprep.subr.mxu0 0.0
    %2130 = vmatpush2.msra.mxu0 0.0
    %2131 = vmatprep.subr.mxu0 0.0
    %2132 = vmatpush2.msra.mxu0 0.0
    %2133 = vmatprep.subr.mxu0 0.0
    %2134 = vmatpush2.msra.mxu0 0.0
    %2135 = vmatprep.subr.mxu0 0.0
    %2136 = vmatpush2.msra.mxu0 0.0
    %2137 = vmatprep.mubr.f32.mxu0 0.0
    %2138 = vmatmul.mubr.f32.gmra.mxu0 %v1861
    %v2139 = vpop.f32.mrf.mxu0
    %v2140 = vadd.f32 0.0, %v2139
    %v2141 = vpop.f32.mrf.mxu0
    %2142 = vdwg.mxu0
    %2143 = vmatprep.subr.mxu0 0.0
    %2144 = vmatpush1.msra.mxu0 0.0
    %2145 = vmatprep.subr.mxu0 0.0
    %2146 = vmatpush1.msra.mxu0 0.0
    %2147 = vmatprep.subr.mxu0 0.0
    %2148 = vmatpush1.msra.mxu0 0.0
    %2149 = vmatprep.subr.mxu0 0.0
    %2150 = vmatpush1.msra.mxu0 0.0
    %2151 = vmatprep.subr.mxu0 0.0
    %2152 = vmatpush1.msra.mxu0 0.0
    %2153 = vmatprep.subr.mxu0 0.0
    %2154 = vmatpush1.msra.mxu0 0.0
    %2155 = vmatprep.subr.mxu0 0.0
    %2156 = vmatpush1.msra.mxu0 0.0
    %2157 = vmatprep.subr.mxu0 0.0
    %2158 = vmatpush1.msra.mxu0 0.0
    %2159 = vmatprep.subr.mxu0 0.0
    %2160 = vmatpush1.msra.mxu0 0.0
    %2161 = vmatprep.subr.mxu0 0.0
    %2162 = vmatpush1.msra.mxu0 0.0
    %2163 = vmatprep.subr.mxu0 0.0
    %2164 = vmatpush1.msra.mxu0 0.0
    %2165 = vmatprep.subr.mxu0 0.0
    %2166 = vmatpush1.msra.mxu0 0.0
    %2167 = vmatprep.subr.mxu0 0.0
    %2168 = vmatpush1.msra.mxu0 0.0
    %2169 = vmatprep.subr.mxu0 0.0
    %2170 = vmatpush1.msra.mxu0 0.0
    %2171 = vmatprep.subr.mxu0 0.0
    %2172 = vmatpush1.msra.mxu0 0.0
    %2173 = vmatprep.subr.mxu0 0.0
    %2174 = vmatpush1.msra.mxu0 %v1639
    %2175 = vmatprep.subr.mxu0 0.0
    %2176 = vmatpush2.msra.mxu0 0.0
    %2177 = vmatprep.subr.mxu0 0.0
    %2178 = vmatpush2.msra.mxu0 0.0
    %2179 = vmatprep.subr.mxu0 0.0
    %2180 = vmatpush2.msra.mxu0 0.0
    %2181 = vmatprep.subr.mxu0 0.0
    %2182 = vmatpush2.msra.mxu0 0.0
    %2183 = vmatprep.subr.mxu0 0.0
    %2184 = vmatpush2.msra.mxu0 0.0
    %2185 = vmatprep.subr.mxu0 0.0
    %2186 = vmatpush2.msra.mxu0 0.0
    %2187 = vmatprep.subr.mxu0 0.0
    %2188 = vmatpush2.msra.mxu0 0.0
    %2189 = vmatprep.subr.mxu0 0.0
    %2190 = vmatpush2.msra.mxu0 0.0
    %2191 = vmatprep.subr.mxu0 0.0
    %2192 = vmatpush2.msra.mxu0 0.0
    %2193 = vmatprep.subr.mxu0 0.0
    %2194 = vmatpush2.msra.mxu0 0.0
    %2195 = vmatprep.subr.mxu0 0.0
    %2196 = vmatpush2.msra.mxu0 0.0
    %2197 = vmatprep.subr.mxu0 0.0
    %2198 = vmatpush2.msra.mxu0 0.0
    %2199 = vmatprep.subr.mxu0 0.0
    %2200 = vmatpush2.msra.mxu0 0.0
    %2201 = vmatprep.subr.mxu0 0.0
    %2202 = vmatpush2.msra.mxu0 0.0
    %2203 = vmatprep.subr.mxu0 0.0
    %2204 = vmatpush2.msra.mxu0 0.0
    %2205 = vmatprep.subr.mxu0 0.0
    %2206 = vmatpush2.msra.mxu0 0.0
    %2207 = vmatprep.mubr.f32.mxu0 0.0
    %2208 = vmatmul.mubr.f32.gmra.mxu0 %v1861
    %v2209 = vpop.f32.mrf.mxu0
    %v2210 = vadd.f32 0.0, %v2209
    %v2211 = vpop.f32.mrf.mxu0
    %2212 = vdwg.mxu0
    %2213 = vmatprep.subr.mxu0 0.0
    %2214 = vmatpush1.msra.mxu0 0.0
    %2215 = vmatprep.subr.mxu0 0.0
    %2216 = vmatpush1.msra.mxu0 0.0
    %2217 = vmatprep.subr.mxu0 0.0
    %2218 = vmatpush1.msra.mxu0 0.0
    %2219 = vmatprep.subr.mxu0 0.0
    %2220 = vmatpush1.msra.mxu0 0.0
    %2221 = vmatprep.subr.mxu0 0.0
    %2222 = vmatpush1.msra.mxu0 0.0
    %2223 = vmatprep.subr.mxu0 0.0
    %2224 = vmatpush1.msra.mxu0 0.0
    %2225 = vmatprep.subr.mxu0 0.0
    %2226 = vmatpush1.msra.mxu0 0.0
    %2227 = vmatprep.subr.mxu0 0.0
    %2228 = vmatpush1.msra.mxu0 0.0
    %2229 = vmatprep.subr.mxu0 0.0
    %2230 = vmatpush1.msra.mxu0 0.0
    %2231 = vmatprep.subr.mxu0 0.0
    %2232 = vmatpush1.msra.mxu0 0.0
    %2233 = vmatprep.subr.mxu0 0.0
    %2234 = vmatpush1.msra.mxu0 0.0
    %2235 = vmatprep.subr.mxu0 0.0
    %2236 = vmatpush1.msra.mxu0 0.0
    %2237 = vmatprep.subr.mxu0 0.0
    %2238 = vmatpush1.msra.mxu0 0.0
    %2239 = vmatprep.subr.mxu0 0.0
    %2240 = vmatpush1.msra.mxu0 0.0
    %2241 = vmatprep.subr.mxu0 0.0
    %2242 = vmatpush1.msra.mxu0 0.0
    %2243 = vmatprep.subr.mxu0 0.0
    %2244 = vmatpush1.msra.mxu0 %v1712
    %2245 = vmatprep.subr.mxu0 0.0
    %2246 = vmatpush2.msra.mxu0 0.0
    %2247 = vmatprep.subr.mxu0 0.0
    %2248 = vmatpush2.msra.mxu0 0.0
    %2249 = vmatprep.subr.mxu0 0.0
    %2250 = vmatpush2.msra.mxu0 0.0
    %2251 = vmatprep.subr.mxu0 0.0
    %2252 = vmatpush2.msra.mxu0 0.0
    %2253 = vmatprep.subr.mxu0 0.0
    %2254 = vmatpush2.msra.mxu0 0.0
    %2255 = vmatprep.subr.mxu0 0.0
    %2256 = vmatpush2.msra.mxu0 0.0
    %2257 = vmatprep.subr.mxu0 0.0
    %2258 = vmatpush2.msra.mxu0 0.0
    %2259 = vmatprep.subr.mxu0 0.0
    %2260 = vmatpush2.msra.mxu0 0.0
    %2261 = vmatprep.subr.mxu0 0.0
    %2262 = vmatpush2.msra.mxu0 0.0
    %2263 = vmatprep.subr.mxu0 0.0
    %2264 = vmatpush2.msra.mxu0 0.0
    %2265 = vmatprep.subr.mxu0 0.0
    %2266 = vmatpush2.msra.mxu0 0.0
    %2267 = vmatprep.subr.mxu0 0.0
    %2268 = vmatpush2.msra.mxu0 0.0
    %2269 = vmatprep.subr.mxu0 0.0
    %2270 = vmatpush2.msra.mxu0 0.0
    %2271 = vmatprep.subr.mxu0 0.0
    %2272 = vmatpush2.msra.mxu0 0.0
    %2273 = vmatprep.subr.mxu0 0.0
    %2274 = vmatpush2.msra.mxu0 0.0
    %2275 = vmatprep.subr.mxu0 0.0
    %2276 = vmatpush2.msra.mxu0 0.0
    %2277 = vmatprep.mubr.f32.mxu0 0.0
    %2278 = vmatmul.mubr.f32.gmra.mxu0 %v1861
    %v2279 = vpop.f32.mrf.mxu0
    %v2280 = vadd.f32 0.0, %v2279
    %v2281 = vpop.f32.mrf.mxu0
    %2282 = vdwg.mxu0
    %2283 = vmatprep.subr.mxu0 0.0
    %2284 = vmatpush1.msra.mxu0 0.0
    %2285 = vmatprep.subr.mxu0 0.0
    %2286 = vmatpush1.msra.mxu0 0.0
    %2287 = vmatprep.subr.mxu0 0.0
    %2288 = vmatpush1.msra.mxu0 0.0
    %2289 = vmatprep.subr.mxu0 0.0
    %2290 = vmatpush1.msra.mxu0 0.0
    %2291 = vmatprep.subr.mxu0 0.0
    %2292 = vmatpush1.msra.mxu0 0.0
    %2293 = vmatprep.subr.mxu0 0.0
    %2294 = vmatpush1.msra.mxu0 0.0
    %2295 = vmatprep.subr.mxu0 0.0
    %2296 = vmatpush1.msra.mxu0 0.0
    %2297 = vmatprep.subr.mxu0 0.0
    %2298 = vmatpush1.msra.mxu0 0.0
    %2299 = vmatprep.subr.mxu0 0.0
    %2300 = vmatpush1.msra.mxu0 0.0
    %2301 = vmatprep.subr.mxu0 0.0
    %2302 = vmatpush1.msra.mxu0 0.0
    %2303 = vmatprep.subr.mxu0 0.0
    %2304 = vmatpush1.msra.mxu0 0.0
    %2305 = vmatprep.subr.mxu0 0.0
    %2306 = vmatpush1.msra.mxu0 0.0
    %2307 = vmatprep.subr.mxu0 0.0
    %2308 = vmatpush1.msra.mxu0 0.0
    %2309 = vmatprep.subr.mxu0 0.0
    %2310 = vmatpush1.msra.mxu0 0.0
    %2311 = vmatprep.subr.mxu0 0.0
    %2312 = vmatpush1.msra.mxu0 0.0
    %2313 = vmatprep.subr.mxu0 0.0
    %2314 = vmatpush1.msra.mxu0 %v1785
    %2315 = vmatprep.subr.mxu0 0.0
    %2316 = vmatpush2.msra.mxu0 0.0
    %2317 = vmatprep.subr.mxu0 0.0
    %2318 = vmatpush2.msra.mxu0 0.0
    %2319 = vmatprep.subr.mxu0 0.0
    %2320 = vmatpush2.msra.mxu0 0.0
    %2321 = vmatprep.subr.mxu0 0.0
    %2322 = vmatpush2.msra.mxu0 0.0
    %2323 = vmatprep.subr.mxu0 0.0
    %2324 = vmatpush2.msra.mxu0 0.0
    %2325 = vmatprep.subr.mxu0 0.0
    %2326 = vmatpush2.msra.mxu0 0.0
    %2327 = vmatprep.subr.mxu0 0.0
    %2328 = vmatpush2.msra.mxu0 0.0
    %2329 = vmatprep.subr.mxu0 0.0
    %2330 = vmatpush2.msra.mxu0 0.0
    %2331 = vmatprep.subr.mxu0 0.0
    %2332 = vmatpush2.msra.mxu0 0.0
    %2333 = vmatprep.subr.mxu0 0.0
    %2334 = vmatpush2.msra.mxu0 0.0
    %2335 = vmatprep.subr.mxu0 0.0
    %2336 = vmatpush2.msra.mxu0 0.0
    %2337 = vmatprep.subr.mxu0 0.0
    %2338 = vmatpush2.msra.mxu0 0.0
    %2339 = vmatprep.subr.mxu0 0.0
    %2340 = vmatpush2.msra.mxu0 0.0
    %2341 = vmatprep.subr.mxu0 0.0
    %2342 = vmatpush2.msra.mxu0 0.0
    %2343 = vmatprep.subr.mxu0 0.0
    %2344 = vmatpush2.msra.mxu0 0.0
    %2345 = vmatprep.subr.mxu0 0.0
    %2346 = vmatpush2.msra.mxu0 0.0
    %2347 = vmatprep.mubr.f32.mxu0 0.0
    %2348 = vmatmul.mubr.f32.gmra.mxu0 %v1861
    %v2349 = vpop.f32.mrf.mxu0
    %v2350 = vadd.f32 0.0, %v2349
    %v2351 = vpop.f32.mrf.mxu0
    %2352 = vdwg.mxu0
    %2353 = vmatprep.subr.mxu0 0.0
    %2354 = vmatpush1.msra.mxu0 0.0
    %2355 = vmatprep.subr.mxu0 0.0
    %2356 = vmatpush1.msra.mxu0 0.0
    %2357 = vmatprep.subr.mxu0 0.0
    %2358 = vmatpush1.msra.mxu0 0.0
    %2359 = vmatprep.subr.mxu0 0.0
    %2360 = vmatpush1.msra.mxu0 0.0
    %2361 = vmatprep.subr.mxu0 0.0
    %2362 = vmatpush1.msra.mxu0 0.0
    %2363 = vmatprep.subr.mxu0 0.0
    %2364 = vmatpush1.msra.mxu0 0.0
    %2365 = vmatprep.subr.mxu0 0.0
    %2366 = vmatpush1.msra.mxu0 0.0
    %2367 = vmatprep.subr.mxu0 0.0
    %2368 = vmatpush1.msra.mxu0 0.0
    %2369 = vmatprep.subr.mxu0 0.0
    %2370 = vmatpush1.msra.mxu0 0.0
    %2371 = vmatprep.subr.mxu0 0.0
    %2372 = vmatpush1.msra.mxu0 0.0
    %2373 = vmatprep.subr.mxu0 0.0
    %2374 = vmatpush1.msra.mxu0 0.0
    %2375 = vmatprep.subr.mxu0 0.0
    %2376 = vmatpush1.msra.mxu0 0.0
    %2377 = vmatprep.subr.mxu0 0.0
    %2378 = vmatpush1.msra.mxu0 0.0
    %2379 = vmatprep.subr.mxu0 0.0
    %2380 = vmatpush1.msra.mxu0 0.0
    %2381 = vmatprep.subr.mxu0 0.0
    %2382 = vmatpush1.msra.mxu0 0.0
    %2383 = vmatprep.subr.mxu0 0.0
    %2384 = vmatpush1.msra.mxu0 %v1858
    %2385 = vmatprep.subr.mxu0 0.0
    %2386 = vmatpush2.msra.mxu0 0.0
    %2387 = vmatprep.subr.mxu0 0.0
    %2388 = vmatpush2.msra.mxu0 0.0
    %2389 = vmatprep.subr.mxu0 0.0
    %2390 = vmatpush2.msra.mxu0 0.0
    %2391 = vmatprep.subr.mxu0 0.0
    %2392 = vmatpush2.msra.mxu0 0.0
    %2393 = vmatprep.subr.mxu0 0.0
    %2394 = vmatpush2.msra.mxu0 0.0
    %2395 = vmatprep.subr.mxu0 0.0
    %2396 = vmatpush2.msra.mxu0 0.0
    %2397 = vmatprep.subr.mxu0 0.0
    %2398 = vmatpush2.msra.mxu0 0.0
    %2399 = vmatprep.subr.mxu0 0.0
    %2400 = vmatpush2.msra.mxu0 0.0
    %2401 = vmatprep.subr.mxu0 0.0
    %2402 = vmatpush2.msra.mxu0 0.0
    %2403 = vmatprep.subr.mxu0 0.0
    %2404 = vmatpush2.msra.mxu0 0.0
    %2405 = vmatprep.subr.mxu0 0.0
    %2406 = vmatpush2.msra.mxu0 0.0
    %2407 = vmatprep.subr.mxu0 0.0
    %2408 = vmatpush2.msra.mxu0 0.0
    %2409 = vmatprep.subr.mxu0 0.0
    %2410 = vmatpush2.msra.mxu0 0.0
    %2411 = vmatprep.subr.mxu0 0.0
    %2412 = vmatpush2.msra.mxu0 0.0
    %2413 = vmatprep.subr.mxu0 0.0
    %2414 = vmatpush2.msra.mxu0 0.0
    %2415 = vmatprep.subr.mxu0 0.0
    %2416 = vmatpush2.msra.mxu0 0.0
    %2417 = vmatprep.mubr.f32.mxu0 0.0
    %2418 = vmatmul.mubr.f32.gmra.mxu0 %v1861
    %v2419 = vpop.f32.mrf.mxu0
    %v2420 = vadd.f32 0.0, %v2419
    %v2421 = vpop.f32.mrf.mxu0
    %2422 = vdwg.mxu0
    %v2423 = vmul.f32 %v1930, 0.012345679
    %v2424 = vmul.f32 %v2000, 0.012345679
    %v2425 = vmul.f32 %v2070, 0.012345679
    %v2426 = vmul.f32 %v2140, 0.012345679
    %v2427 = vmul.f32 %v2210, 0.012345679
    %v2428 = vmul.f32 %v2280, 0.012345679
    %v2429 = vmul.f32 %v2350, 0.012345679
    %v2430 = vmul.f32 %v2420, 0.012345679
    %vm2431 = vcmask 27648
    %2432 = vst.msk [vmem:[%s1] sm:$0xf] %vm2431, %v2423
    %2433 = vst.msk [vmem:[%s1 + $0x4] sm:$0xf] %vm2431, %v2424
    %2434 = vst.msk [vmem:[%s1 + $0x8] sm:$0xf] %vm2431, %v2425
    %2435 = vst.msk [vmem:[%s1 + $0xc] sm:$0xf] %vm2431, %v2426
    %2436 = vst.msk [vmem:[%s1 + $0x10] sm:$0xf] %vm2431, %v2427
    %2437 = vst.msk [vmem:[%s1 + $0x14] sm:$0xf] %vm2431, %v2428
    %2438 = vst.msk [vmem:[%s1 + $0x18] sm:$0xf] %vm2431, %v2429
    %2439 = vst.msk [vmem:[%s1 + $0x1c] sm:$0xf] %vm2431, %v2430
    // Predicated region
    $region10: #{tpu_custom_call.1} parent=1 // pred_check
      _
    $region11: #{tpu_custom_call.1} parent=1 // pred_check_branch
      %2441 = sbr.rel (0) target = $region13
    $region12: #{tpu_custom_call.1} parent=1 // pred_region
      _
    $region13: #{tpu_custom_call.1} parent=1 // pred_fallthru
      _
    // Predicated region
    $region14: #{tpu_custom_call.1} parent=1 // pred_check
      _
    $region15: #{tpu_custom_call.1} parent=1 // pred_check_branch
      %2443 = sbr.rel (0) target = $region17
    $region16: #{tpu_custom_call.1} parent=1 // pred_region
      _
    $region17: #{tpu_custom_call.1} parent=1 // pred_fallthru
      _
    %2444 = vsyncpa [#allocation3], 1

</llo_original>
